<compile_context>
chip_gen: v5e
topology: v5e:2x2
jax: 0.10.0
libtpu: 0.0.40
codegen_flags: <defaults>
</compile_context>

<pallas_src>
import jax
import jax.numpy as jnp
from jax.experimental import pallas as pl
from jax.experimental.pallas import tpu as pltpu  # noqa: F401  (imported for TPU backend symbols)


# ----------------------------------------------------------------------------
# Fused kernel: unrolled 2-layer LSTM recurrence + MLP head, single invocation.
# ----------------------------------------------------------------------------
def _net2_kernel(xp_ref, whh1_ref, wih2_ref, whh2_ref, b2_ref, oi_ref,
                 wl1h_ref, wl1o_ref, bl1_ref, wl2_ref, bl2_ref, wl3_ref, bl3_ref,
                 y_ref, h_out_ref, c_out_ref):
    T, B, G = xp_ref.shape
    H = G // 4

    # Hoist constant loads / broadcasts out of the unrolled time loop.
    whh1 = whh1_ref[...]
    wih2 = wih2_ref[...]
    whh2 = whh2_ref[...]
    b2 = jnp.broadcast_to(b2_ref[...], (B, G))

    def gates_to_hc(gates, c_prev):
        # Two whole-vreg EUP activations instead of four 32-lane sliced ones.
        sig = jax.nn.sigmoid(gates)
        th = jnp.tanh(gates)
        i = sig[:, 0 * H:1 * H]
        f = sig[:, 1 * H:2 * H]
        g = th[:, 2 * H:3 * H]
        o = sig[:, 3 * H:4 * H]
        c_new = f * c_prev + i * g
        h_new = o * jnp.tanh(c_new)
        return h_new, c_new

    z = jnp.zeros((B, H), jnp.float32)
    h1, c1, h2, c2 = z, z, z, z

    # Fully unrolled recurrence (T small & static): straight-line code, state stays in vregs.
    for t in range(T):
        # Layer 1: x-projection (incl. combined bias) precomputed outside the kernel;
        # only the recurrent matmul is left on the serial critical path.
        g1 = xp_ref[t] + jnp.dot(h1, whh1, preferred_element_type=jnp.float32)
        h1, c1 = gates_to_hc(g1, c1)
        # Layer 2 (inter-layer dropout = identity at inference). Two dots instead of a
        # lane-concat: dot(h2_prev, whh2) is off the critical path and overlaps layer 1.
        g2 = (jnp.dot(h1, wih2, preferred_element_type=jnp.float32)
              + jnp.dot(h2, whh2, preferred_element_type=jnp.float32)
              + b2)
        h2, c2 = gates_to_hc(g2, c2)

    # Fused MLP head on the final hidden state; concat(h2, other_info) @ W_l1 is expressed
    # as two dots against the split halves of W_l1 (no in-kernel concat).
    a = (jnp.dot(h2, wl1h_ref[...], preferred_element_type=jnp.float32)
         + jnp.dot(oi_ref[...], wl1o_ref[...], preferred_element_type=jnp.float32)
         + bl1_ref[...])
    a = jnp.maximum(a, 0.0)
    a = jnp.dot(a, wl2_ref[...], preferred_element_type=jnp.float32) + bl2_ref[...]
    a = jnp.maximum(a, 0.0)
    y_ref[...] = jnp.dot(a, wl3_ref[...], preferred_element_type=jnp.float32) + bl3_ref[...]

    # states = (h_n, c_n), PyTorch layout (num_layers=2, B, H)
    h_out_ref[0] = h1
    h_out_ref[1] = h2
    c_out_ref[0] = c1
    c_out_ref[1] = c2


def network2_kernel_call(xp, whh1, wih2, whh2, b2, other_info,
                         wl1h, wl1o, bl1, wl2, bl2, wl3, bl3):
    """xp: (T, B, 4H) precomputed layer-1 input projection (bias folded)."""
    T, B, G = xp.shape
    H = G // 4
    n_out = wl3.shape[1]
    return pl.pallas_call(
        _net2_kernel,
        out_shape=(
            jax.ShapeDtypeStruct((B, n_out), jnp.float32),   # y_out
            jax.ShapeDtypeStruct((2, B, H), jnp.float32),    # h_n
            jax.ShapeDtypeStruct((2, B, H), jnp.float32),    # c_n
        ),
    )(xp, whh1, wih2, whh2, b2, other_info, wl1h, wl1o, bl1, wl2, bl2, wl3, bl3)


# ----------------------------------------------------------------------------
# Full Network2 forward.
# ----------------------------------------------------------------------------
def init_params(key, n_vocab, n_embd, n_rnn_hidden, n_other_info, n_ann_hidden, n_out):
    keys = jax.random.split(key, 16)
    s = 0.1
    H = n_rnn_hidden
    p = {
        "emb": jax.random.normal(keys[0], (n_vocab, n_embd), jnp.float32) * s,
        # LSTM layer 1 (stored already transposed: (in, 4H)), bias = b_ih + b_hh
        "wih1": jax.random.normal(keys[1], (n_embd, 4 * H), jnp.float32) * s,
        "whh1": jax.random.normal(keys[2], (H, 4 * H), jnp.float32) * s,
        "b1": jax.random.normal(keys[3], (1, 4 * H), jnp.float32) * s,
        # LSTM layer 2
        "wih2": jax.random.normal(keys[4], (H, 4 * H), jnp.float32) * s,
        "whh2": jax.random.normal(keys[5], (H, 4 * H), jnp.float32) * s,
        "b2": jax.random.normal(keys[6], (1, 4 * H), jnp.float32) * s,
        # MLP
        "w_l1": jax.random.normal(keys[7], (H + n_other_info, n_ann_hidden), jnp.float32) * s,
        "b_l1": jax.random.normal(keys[8], (1, n_ann_hidden), jnp.float32) * s,
        "w_l2": jax.random.normal(keys[9], (n_ann_hidden, n_ann_hidden), jnp.float32) * s,
        "b_l2": jax.random.normal(keys[10], (1, n_ann_hidden), jnp.float32) * s,
        "w_l3": jax.random.normal(keys[11], (n_ann_hidden, n_out), jnp.float32) * s,
        "b_l3": jax.random.normal(keys[12], (1, n_out), jnp.float32) * s,
    }
    return p


@jax.jit
def network2_forward(params, tweet, other_info):
    H = params["whh1"].shape[0]
    # Embedding lookup (gather) in plain JAX glue.
    tw_embd = jnp.take(params["emb"], tweet, axis=0)                  # (B, T, E)
    # Hoisted, MXU-dense layer-1 input projection (one batched matmul), combined bias folded
    # in; produced directly time-major so the kernel indexes the leading dim (no extra
    # transpose copy of the embedded input).
    xp = jnp.einsum("bte,eg->tbg", tw_embd, params["wih1"],
                    preferred_element_type=jnp.float32) + params["b1"]  # (T, B, 4H)
    y, h_n, c_n = network2_kernel_call(
        xp, params["whh1"], params["wih2"], params["whh2"], params["b2"],
        other_info,
        params["w_l1"][:H], params["w_l1"][H:], params["b_l1"],
        params["w_l2"], params["b_l2"], params["w_l3"], params["b_l3"])
    return y, (h_n, c_n)


# ----------------------------------------------------------------------------
# Pure-JAX reference (for correctness sanity check).
# ----------------------------------------------------------------------------
def reference_forward(params, tweet, other_info):
    tw = jnp.take(params["emb"], tweet, axis=0)  # (B, T, E)
    H = params["whh1"].shape[0]

    def cell(x, h, c, wih, whh, b):
        g = x @ wih + h @ whh + b
        i = jax.nn.sigmoid(g[:, 0 * H:1 * H])
        f = jax.nn.sigmoid(g[:, 1 * H:2 * H])
        gg = jnp.tanh(g[:, 2 * H:3 * H])
        o = jax.nn.sigmoid(g[:, 3 * H:4 * H])
        c2 = f * c + i * gg
        return o * jnp.tanh(c2), c2

    def scan_fn(carry, x_t):
        h1, c1, h2, c2 = carry
        h1, c1 = cell(x_t, h1, c1, params["wih1"], params["whh1"], params["b1"])
        h2, c2 = cell(h1, h2, c2, params["wih2"], params["whh2"], params["b2"])
        return (h1, c1, h2, c2), h2

    B = tweet.shape[0]
    z = jnp.zeros((B, H), jnp.float32)
    (h1, c1, h2, c2), outs = jax.lax.scan(scan_fn, (z, z, z, z),
                                          jnp.transpose(tw, (1, 0, 2)))
    d = jnp.concatenate([outs[-1], other_info], axis=1)
    h = jnp.maximum(d @ params["w_l1"] + params["b_l1"], 0.0)
    h = jnp.maximum(h @ params["w_l2"] + params["b_l2"], 0.0)
    y = h @ params["w_l3"] + params["b_l3"]
    return y, (jnp.stack([h1, h2]), jnp.stack([c1, c2]))


if __name__ == "__main__":
    # Small, module-consistent shapes.
    n_vocab, n_embd = 50, 16
    n_rnn_hidden, n_other_info = 32, 8
    n_ann_hidden, n_out = 32, 3
    B, T = 2, 8

    key = jax.random.PRNGKey(0)
    k_p, k_tw, k_oi = jax.random.split(key, 3)
    params = init_params(k_p, n_vocab, n_embd, n_rnn_hidden,
                         n_other_info, n_ann_hidden, n_out)

    tweet = jax.random.randint(k_tw, (B, T), 0, n_vocab, dtype=jnp.int32)
    other_info = jax.random.normal(k_oi, (B, n_other_info), jnp.float32)

    y, (h_n, c_n) = network2_forward(params, tweet, other_info)
    y = jax.block_until_ready(y)
    h_n = jax.block_until_ready(h_n)
    c_n = jax.block_until_ready(c_n)

    y_ref, (h_ref, c_ref) = reference_forward(params, tweet, other_info)
    assert y.shape == (B, n_out)
    assert h_n.shape == (2, B, n_rnn_hidden) and c_n.shape == (2, B, n_rnn_hidden)
    assert jnp.allclose(y, y_ref, atol=1e-4, rtol=1e-4)
    assert jnp.allclose(h_n, h_ref, atol=1e-4, rtol=1e-4)
    assert jnp.allclose(c_n, c_ref, atol=1e-4, rtol=1e-4)

    print("KERNEL_OK")
</pallas_src>

<mosaic_0001>
module attributes {stable_mosaic.version = 11 : i64} {
  func.func @_net2_kernel(%arg0: memref<8x2x128xf32, #tpu.memory_space<vmem>>, %arg1: memref<32x128xf32, #tpu.memory_space<vmem>>, %arg2: memref<32x128xf32, #tpu.memory_space<vmem>>, %arg3: memref<32x128xf32, #tpu.memory_space<vmem>>, %arg4: memref<1x128xf32, #tpu.memory_space<vmem>>, %arg5: memref<2x8xf32, #tpu.memory_space<vmem>>, %arg6: memref<32x32xf32, #tpu.memory_space<vmem>>, %arg7: memref<8x32xf32, #tpu.memory_space<vmem>>, %arg8: memref<1x32xf32, #tpu.memory_space<vmem>>, %arg9: memref<32x32xf32, #tpu.memory_space<vmem>>, %arg10: memref<1x32xf32, #tpu.memory_space<vmem>>, %arg11: memref<32x3xf32, #tpu.memory_space<vmem>>, %arg12: memref<1x3xf32, #tpu.memory_space<vmem>>, %arg13: memref<2x3xf32, #tpu.memory_space<vmem>>, %arg14: memref<2x2x32xf32, #tpu.memory_space<vmem>>, %arg15: memref<2x2x32xf32, #tpu.memory_space<vmem>>) attributes {dimension_semantics = [], scalar_prefetch = 0 : i64, scratch_operands = 0 : i64, tpu.core_type = #tpu.core_type<tc>} {
    %c0 = arith.constant 0 : index
    %c0_0 = arith.constant 0 : index
    %0 = vector.load %arg1[%c0, %c0_0] : memref<32x128xf32, #tpu.memory_space<vmem>>, vector<32x128xf32>
    %c0_1 = arith.constant 0 : index
    %c0_2 = arith.constant 0 : index
    %1 = vector.load %arg2[%c0_1, %c0_2] : memref<32x128xf32, #tpu.memory_space<vmem>>, vector<32x128xf32>
    %c0_3 = arith.constant 0 : index
    %c0_4 = arith.constant 0 : index
    %2 = vector.load %arg3[%c0_3, %c0_4] : memref<32x128xf32, #tpu.memory_space<vmem>>, vector<32x128xf32>
    %c0_5 = arith.constant 0 : index
    %c0_6 = arith.constant 0 : index
    %3 = vector.load %arg4[%c0_5, %c0_6] : memref<1x128xf32, #tpu.memory_space<vmem>>, vector<1x128xf32>
    %4 = vector.shape_cast %3 : vector<1x128xf32> to vector<1x128xf32>
    %5 = vector.broadcast %4 : vector<1x128xf32> to vector<2x128xf32>
    %cst = arith.constant 0.000000e+00 : f32
    %6 = vector.broadcast %cst : f32 to vector<2x32xf32>
    %c0_7 = arith.constant 0 : index
    %c0_8 = arith.constant 0 : index
    %c0_9 = arith.constant 0 : index
    %7 = vector.load %arg0[%c0_7, %c0_8, %c0_9] : memref<8x2x128xf32, #tpu.memory_space<vmem>>, vector<1x2x128xf32>
    %8 = vector.shape_cast %7 : vector<1x2x128xf32> to vector<2x128xf32>
    %cst_10 = arith.constant dense<0.000000e+00> : vector<2x128xf32>
    %9 = tpu.matmul %6, %0, %cst_10 {dimension_numbers = #tpu.dot_dimension_numbers<[1], [0], [0], [1], [0, 0, 1, 1], [], []>} : vector<2x32xf32>, vector<32x128xf32>, vector<2x128xf32> -> vector<2x128xf32>
    %10 = arith.addf %8, %9 : vector<2x128xf32>
    %11 = arith.negf %10 : vector<2x128xf32>
    %12 = math.exp %11 : vector<2x128xf32>
    %cst_11 = arith.constant 1.000000e+00 : f32
    %13 = vector.broadcast %cst_11 : f32 to vector<2x128xf32>
    %14 = arith.addf %13, %12 : vector<2x128xf32>
    %15 = arith.divf %13, %14 : vector<2x128xf32>
    %16 = math.tanh %10 : vector<2x128xf32>
    %17 = vector.extract_strided_slice %15 {offsets = [0, 0], sizes = [2, 32], strides = [1, 1]} : vector<2x128xf32> to vector<2x32xf32>
    %18 = vector.extract_strided_slice %15 {offsets = [0, 32], sizes = [2, 32], strides = [1, 1]} : vector<2x128xf32> to vector<2x32xf32>
    %19 = vector.extract_strided_slice %16 {offsets = [0, 64], sizes = [2, 32], strides = [1, 1]} : vector<2x128xf32> to vector<2x32xf32>
    %20 = vector.extract_strided_slice %15 {offsets = [0, 96], sizes = [2, 32], strides = [1, 1]} : vector<2x128xf32> to vector<2x32xf32>
    %21 = arith.mulf %18, %6 : vector<2x32xf32>
    %22 = arith.mulf %17, %19 : vector<2x32xf32>
    %23 = arith.addf %21, %22 : vector<2x32xf32>
    %24 = math.tanh %23 : vector<2x32xf32>
    %25 = arith.mulf %20, %24 : vector<2x32xf32>
    %cst_12 = arith.constant dense<0.000000e+00> : vector<2x128xf32>
    %26 = tpu.matmul %25, %1, %cst_12 {dimension_numbers = #tpu.dot_dimension_numbers<[1], [0], [0], [1], [0, 0, 1, 1], [], []>} : vector<2x32xf32>, vector<32x128xf32>, vector<2x128xf32> -> vector<2x128xf32>
    %cst_13 = arith.constant dense<0.000000e+00> : vector<2x128xf32>
    %27 = tpu.matmul %6, %2, %cst_13 {dimension_numbers = #tpu.dot_dimension_numbers<[1], [0], [0], [1], [0, 0, 1, 1], [], []>} : vector<2x32xf32>, vector<32x128xf32>, vector<2x128xf32> -> vector<2x128xf32>
    %28 = arith.addf %26, %27 : vector<2x128xf32>
    %29 = arith.addf %28, %5 : vector<2x128xf32>
    %30 = arith.negf %29 : vector<2x128xf32>
    %31 = math.exp %30 : vector<2x128xf32>
    %cst_14 = arith.constant 1.000000e+00 : f32
    %32 = vector.broadcast %cst_14 : f32 to vector<2x128xf32>
    %33 = arith.addf %32, %31 : vector<2x128xf32>
    %34 = arith.divf %32, %33 : vector<2x128xf32>
    %35 = math.tanh %29 : vector<2x128xf32>
    %36 = vector.extract_strided_slice %34 {offsets = [0, 0], sizes = [2, 32], strides = [1, 1]} : vector<2x128xf32> to vector<2x32xf32>
    %37 = vector.extract_strided_slice %34 {offsets = [0, 32], sizes = [2, 32], strides = [1, 1]} : vector<2x128xf32> to vector<2x32xf32>
    %38 = vector.extract_strided_slice %35 {offsets = [0, 64], sizes = [2, 32], strides = [1, 1]} : vector<2x128xf32> to vector<2x32xf32>
    %39 = vector.extract_strided_slice %34 {offsets = [0, 96], sizes = [2, 32], strides = [1, 1]} : vector<2x128xf32> to vector<2x32xf32>
    %40 = arith.mulf %37, %6 : vector<2x32xf32>
    %41 = arith.mulf %36, %38 : vector<2x32xf32>
    %42 = arith.addf %40, %41 : vector<2x32xf32>
    %43 = math.tanh %42 : vector<2x32xf32>
    %44 = arith.mulf %39, %43 : vector<2x32xf32>
    %c1 = arith.constant 1 : index
    %c0_15 = arith.constant 0 : index
    %c0_16 = arith.constant 0 : index
    %45 = vector.load %arg0[%c1, %c0_15, %c0_16] : memref<8x2x128xf32, #tpu.memory_space<vmem>>, vector<1x2x128xf32>
    %46 = vector.shape_cast %45 : vector<1x2x128xf32> to vector<2x128xf32>
    %cst_17 = arith.constant dense<0.000000e+00> : vector<2x128xf32>
    %47 = tpu.matmul %25, %0, %cst_17 {dimension_numbers = #tpu.dot_dimension_numbers<[1], [0], [0], [1], [0, 0, 1, 1], [], []>} : vector<2x32xf32>, vector<32x128xf32>, vector<2x128xf32> -> vector<2x128xf32>
    %48 = arith.addf %46, %47 : vector<2x128xf32>
    %49 = arith.negf %48 : vector<2x128xf32>
    %50 = math.exp %49 : vector<2x128xf32>
    %cst_18 = arith.constant 1.000000e+00 : f32
    %51 = vector.broadcast %cst_18 : f32 to vector<2x128xf32>
    %52 = arith.addf %51, %50 : vector<2x128xf32>
    %53 = arith.divf %51, %52 : vector<2x128xf32>
    %54 = math.tanh %48 : vector<2x128xf32>
    %55 = vector.extract_strided_slice %53 {offsets = [0, 0], sizes = [2, 32], strides = [1, 1]} : vector<2x128xf32> to vector<2x32xf32>
    %56 = vector.extract_strided_slice %53 {offsets = [0, 32], sizes = [2, 32], strides = [1, 1]} : vector<2x128xf32> to vector<2x32xf32>
    %57 = vector.extract_strided_slice %54 {offsets = [0, 64], sizes = [2, 32], strides = [1, 1]} : vector<2x128xf32> to vector<2x32xf32>
    %58 = vector.extract_strided_slice %53 {offsets = [0, 96], sizes = [2, 32], strides = [1, 1]} : vector<2x128xf32> to vector<2x32xf32>
    %59 = arith.mulf %56, %23 : vector<2x32xf32>
    %60 = arith.mulf %55, %57 : vector<2x32xf32>
    %61 = arith.addf %59, %60 : vector<2x32xf32>
    %62 = math.tanh %61 : vector<2x32xf32>
    %63 = arith.mulf %58, %62 : vector<2x32xf32>
    %cst_19 = arith.constant dense<0.000000e+00> : vector<2x128xf32>
    %64 = tpu.matmul %63, %1, %cst_19 {dimension_numbers = #tpu.dot_dimension_numbers<[1], [0], [0], [1], [0, 0, 1, 1], [], []>} : vector<2x32xf32>, vector<32x128xf32>, vector<2x128xf32> -> vector<2x128xf32>
    %cst_20 = arith.constant dense<0.000000e+00> : vector<2x128xf32>
    %65 = tpu.matmul %44, %2, %cst_20 {dimension_numbers = #tpu.dot_dimension_numbers<[1], [0], [0], [1], [0, 0, 1, 1], [], []>} : vector<2x32xf32>, vector<32x128xf32>, vector<2x128xf32> -> vector<2x128xf32>
    %66 = arith.addf %64, %65 : vector<2x128xf32>
    %67 = arith.addf %66, %5 : vector<2x128xf32>
    %68 = arith.negf %67 : vector<2x128xf32>
    %69 = math.exp %68 : vector<2x128xf32>
    %cst_21 = arith.constant 1.000000e+00 : f32
    %70 = vector.broadcast %cst_21 : f32 to vector<2x128xf32>
    %71 = arith.addf %70, %69 : vector<2x128xf32>
    %72 = arith.divf %70, %71 : vector<2x128xf32>
    %73 = math.tanh %67 : vector<2x128xf32>
    %74 = vector.extract_strided_slice %72 {offsets = [0, 0], sizes = [2, 32], strides = [1, 1]} : vector<2x128xf32> to vector<2x32xf32>
    %75 = vector.extract_strided_slice %72 {offsets = [0, 32], sizes = [2, 32], strides = [1, 1]} : vector<2x128xf32> to vector<2x32xf32>
    %76 = vector.extract_strided_slice %73 {offsets = [0, 64], sizes = [2, 32], strides = [1, 1]} : vector<2x128xf32> to vector<2x32xf32>
    %77 = vector.extract_strided_slice %72 {offsets = [0, 96], sizes = [2, 32], strides = [1, 1]} : vector<2x128xf32> to vector<2x32xf32>
    %78 = arith.mulf %75, %42 : vector<2x32xf32>
    %79 = arith.mulf %74, %76 : vector<2x32xf32>
    %80 = arith.addf %78, %79 : vector<2x32xf32>
    %81 = math.tanh %80 : vector<2x32xf32>
    %82 = arith.mulf %77, %81 : vector<2x32xf32>
    %c2 = arith.constant 2 : index
    %c0_22 = arith.constant 0 : index
    %c0_23 = arith.constant 0 : index
    %83 = vector.load %arg0[%c2, %c0_22, %c0_23] : memref<8x2x128xf32, #tpu.memory_space<vmem>>, vector<1x2x128xf32>
    %84 = vector.shape_cast %83 : vector<1x2x128xf32> to vector<2x128xf32>
    %cst_24 = arith.constant dense<0.000000e+00> : vector<2x128xf32>
    %85 = tpu.matmul %63, %0, %cst_24 {dimension_numbers = #tpu.dot_dimension_numbers<[1], [0], [0], [1], [0, 0, 1, 1], [], []>} : vector<2x32xf32>, vector<32x128xf32>, vector<2x128xf32> -> vector<2x128xf32>
    %86 = arith.addf %84, %85 : vector<2x128xf32>
    %87 = arith.negf %86 : vector<2x128xf32>
    %88 = math.exp %87 : vector<2x128xf32>
    %cst_25 = arith.constant 1.000000e+00 : f32
    %89 = vector.broadcast %cst_25 : f32 to vector<2x128xf32>
    %90 = arith.addf %89, %88 : vector<2x128xf32>
    %91 = arith.divf %89, %90 : vector<2x128xf32>
    %92 = math.tanh %86 : vector<2x128xf32>
    %93 = vector.extract_strided_slice %91 {offsets = [0, 0], sizes = [2, 32], strides = [1, 1]} : vector<2x128xf32> to vector<2x32xf32>
    %94 = vector.extract_strided_slice %91 {offsets = [0, 32], sizes = [2, 32], strides = [1, 1]} : vector<2x128xf32> to vector<2x32xf32>
    %95 = vector.extract_strided_slice %92 {offsets = [0, 64], sizes = [2, 32], strides = [1, 1]} : vector<2x128xf32> to vector<2x32xf32>
    %96 = vector.extract_strided_slice %91 {offsets = [0, 96], sizes = [2, 32], strides = [1, 1]} : vector<2x128xf32> to vector<2x32xf32>
    %97 = arith.mulf %94, %61 : vector<2x32xf32>
    %98 = arith.mulf %93, %95 : vector<2x32xf32>
    %99 = arith.addf %97, %98 : vector<2x32xf32>
    %100 = math.tanh %99 : vector<2x32xf32>
    %101 = arith.mulf %96, %100 : vector<2x32xf32>
    %cst_26 = arith.constant dense<0.000000e+00> : vector<2x128xf32>
    %102 = tpu.matmul %101, %1, %cst_26 {dimension_numbers = #tpu.dot_dimension_numbers<[1], [0], [0], [1], [0, 0, 1, 1], [], []>} : vector<2x32xf32>, vector<32x128xf32>, vector<2x128xf32> -> vector<2x128xf32>
    %cst_27 = arith.constant dense<0.000000e+00> : vector<2x128xf32>
    %103 = tpu.matmul %82, %2, %cst_27 {dimension_numbers = #tpu.dot_dimension_numbers<[1], [0], [0], [1], [0, 0, 1, 1], [], []>} : vector<2x32xf32>, vector<32x128xf32>, vector<2x128xf32> -> vector<2x128xf32>
    %104 = arith.addf %102, %103 : vector<2x128xf32>
    %105 = arith.addf %104, %5 : vector<2x128xf32>
    %106 = arith.negf %105 : vector<2x128xf32>
    %107 = math.exp %106 : vector<2x128xf32>
    %cst_28 = arith.constant 1.000000e+00 : f32
    %108 = vector.broadcast %cst_28 : f32 to vector<2x128xf32>
    %109 = arith.addf %108, %107 : vector<2x128xf32>
    %110 = arith.divf %108, %109 : vector<2x128xf32>
    %111 = math.tanh %105 : vector<2x128xf32>
    %112 = vector.extract_strided_slice %110 {offsets = [0, 0], sizes = [2, 32], strides = [1, 1]} : vector<2x128xf32> to vector<2x32xf32>
    %113 = vector.extract_strided_slice %110 {offsets = [0, 32], sizes = [2, 32], strides = [1, 1]} : vector<2x128xf32> to vector<2x32xf32>
    %114 = vector.extract_strided_slice %111 {offsets = [0, 64], sizes = [2, 32], strides = [1, 1]} : vector<2x128xf32> to vector<2x32xf32>
    %115 = vector.extract_strided_slice %110 {offsets = [0, 96], sizes = [2, 32], strides = [1, 1]} : vector<2x128xf32> to vector<2x32xf32>
    %116 = arith.mulf %113, %80 : vector<2x32xf32>
    %117 = arith.mulf %112, %114 : vector<2x32xf32>
    %118 = arith.addf %116, %117 : vector<2x32xf32>
    %119 = math.tanh %118 : vector<2x32xf32>
    %120 = arith.mulf %115, %119 : vector<2x32xf32>
    %c3 = arith.constant 3 : index
    %c0_29 = arith.constant 0 : index
    %c0_30 = arith.constant 0 : index
    %121 = vector.load %arg0[%c3, %c0_29, %c0_30] : memref<8x2x128xf32, #tpu.memory_space<vmem>>, vector<1x2x128xf32>
    %122 = vector.shape_cast %121 : vector<1x2x128xf32> to vector<2x128xf32>
    %cst_31 = arith.constant dense<0.000000e+00> : vector<2x128xf32>
    %123 = tpu.matmul %101, %0, %cst_31 {dimension_numbers = #tpu.dot_dimension_numbers<[1], [0], [0], [1], [0, 0, 1, 1], [], []>} : vector<2x32xf32>, vector<32x128xf32>, vector<2x128xf32> -> vector<2x128xf32>
    %124 = arith.addf %122, %123 : vector<2x128xf32>
    %125 = arith.negf %124 : vector<2x128xf32>
    %126 = math.exp %125 : vector<2x128xf32>
    %cst_32 = arith.constant 1.000000e+00 : f32
    %127 = vector.broadcast %cst_32 : f32 to vector<2x128xf32>
    %128 = arith.addf %127, %126 : vector<2x128xf32>
    %129 = arith.divf %127, %128 : vector<2x128xf32>
    %130 = math.tanh %124 : vector<2x128xf32>
    %131 = vector.extract_strided_slice %129 {offsets = [0, 0], sizes = [2, 32], strides = [1, 1]} : vector<2x128xf32> to vector<2x32xf32>
    %132 = vector.extract_strided_slice %129 {offsets = [0, 32], sizes = [2, 32], strides = [1, 1]} : vector<2x128xf32> to vector<2x32xf32>
    %133 = vector.extract_strided_slice %130 {offsets = [0, 64], sizes = [2, 32], strides = [1, 1]} : vector<2x128xf32> to vector<2x32xf32>
    %134 = vector.extract_strided_slice %129 {offsets = [0, 96], sizes = [2, 32], strides = [1, 1]} : vector<2x128xf32> to vector<2x32xf32>
    %135 = arith.mulf %132, %99 : vector<2x32xf32>
    %136 = arith.mulf %131, %133 : vector<2x32xf32>
    %137 = arith.addf %135, %136 : vector<2x32xf32>
    %138 = math.tanh %137 : vector<2x32xf32>
    %139 = arith.mulf %134, %138 : vector<2x32xf32>
    %cst_33 = arith.constant dense<0.000000e+00> : vector<2x128xf32>
    %140 = tpu.matmul %139, %1, %cst_33 {dimension_numbers = #tpu.dot_dimension_numbers<[1], [0], [0], [1], [0, 0, 1, 1], [], []>} : vector<2x32xf32>, vector<32x128xf32>, vector<2x128xf32> -> vector<2x128xf32>
    %cst_34 = arith.constant dense<0.000000e+00> : vector<2x128xf32>
    %141 = tpu.matmul %120, %2, %cst_34 {dimension_numbers = #tpu.dot_dimension_numbers<[1], [0], [0], [1], [0, 0, 1, 1], [], []>} : vector<2x32xf32>, vector<32x128xf32>, vector<2x128xf32> -> vector<2x128xf32>
    %142 = arith.addf %140, %141 : vector<2x128xf32>
    %143 = arith.addf %142, %5 : vector<2x128xf32>
    %144 = arith.negf %143 : vector<2x128xf32>
    %145 = math.exp %144 : vector<2x128xf32>
    %cst_35 = arith.constant 1.000000e+00 : f32
    %146 = vector.broadcast %cst_35 : f32 to vector<2x128xf32>
    %147 = arith.addf %146, %145 : vector<2x128xf32>
    %148 = arith.divf %146, %147 : vector<2x128xf32>
    %149 = math.tanh %143 : vector<2x128xf32>
    %150 = vector.extract_strided_slice %148 {offsets = [0, 0], sizes = [2, 32], strides = [1, 1]} : vector<2x128xf32> to vector<2x32xf32>
    %151 = vector.extract_strided_slice %148 {offsets = [0, 32], sizes = [2, 32], strides = [1, 1]} : vector<2x128xf32> to vector<2x32xf32>
    %152 = vector.extract_strided_slice %149 {offsets = [0, 64], sizes = [2, 32], strides = [1, 1]} : vector<2x128xf32> to vector<2x32xf32>
    %153 = vector.extract_strided_slice %148 {offsets = [0, 96], sizes = [2, 32], strides = [1, 1]} : vector<2x128xf32> to vector<2x32xf32>
    %154 = arith.mulf %151, %118 : vector<2x32xf32>
    %155 = arith.mulf %150, %152 : vector<2x32xf32>
    %156 = arith.addf %154, %155 : vector<2x32xf32>
    %157 = math.tanh %156 : vector<2x32xf32>
    %158 = arith.mulf %153, %157 : vector<2x32xf32>
    %c4 = arith.constant 4 : index
    %c0_36 = arith.constant 0 : index
    %c0_37 = arith.constant 0 : index
    %159 = vector.load %arg0[%c4, %c0_36, %c0_37] : memref<8x2x128xf32, #tpu.memory_space<vmem>>, vector<1x2x128xf32>
    %160 = vector.shape_cast %159 : vector<1x2x128xf32> to vector<2x128xf32>
    %cst_38 = arith.constant dense<0.000000e+00> : vector<2x128xf32>
    %161 = tpu.matmul %139, %0, %cst_38 {dimension_numbers = #tpu.dot_dimension_numbers<[1], [0], [0], [1], [0, 0, 1, 1], [], []>} : vector<2x32xf32>, vector<32x128xf32>, vector<2x128xf32> -> vector<2x128xf32>
    %162 = arith.addf %160, %161 : vector<2x128xf32>
    %163 = arith.negf %162 : vector<2x128xf32>
    %164 = math.exp %163 : vector<2x128xf32>
    %cst_39 = arith.constant 1.000000e+00 : f32
    %165 = vector.broadcast %cst_39 : f32 to vector<2x128xf32>
    %166 = arith.addf %165, %164 : vector<2x128xf32>
    %167 = arith.divf %165, %166 : vector<2x128xf32>
    %168 = math.tanh %162 : vector<2x128xf32>
    %169 = vector.extract_strided_slice %167 {offsets = [0, 0], sizes = [2, 32], strides = [1, 1]} : vector<2x128xf32> to vector<2x32xf32>
    %170 = vector.extract_strided_slice %167 {offsets = [0, 32], sizes = [2, 32], strides = [1, 1]} : vector<2x128xf32> to vector<2x32xf32>
    %171 = vector.extract_strided_slice %168 {offsets = [0, 64], sizes = [2, 32], strides = [1, 1]} : vector<2x128xf32> to vector<2x32xf32>
    %172 = vector.extract_strided_slice %167 {offsets = [0, 96], sizes = [2, 32], strides = [1, 1]} : vector<2x128xf32> to vector<2x32xf32>
    %173 = arith.mulf %170, %137 : vector<2x32xf32>
    %174 = arith.mulf %169, %171 : vector<2x32xf32>
    %175 = arith.addf %173, %174 : vector<2x32xf32>
    %176 = math.tanh %175 : vector<2x32xf32>
    %177 = arith.mulf %172, %176 : vector<2x32xf32>
    %cst_40 = arith.constant dense<0.000000e+00> : vector<2x128xf32>
    %178 = tpu.matmul %177, %1, %cst_40 {dimension_numbers = #tpu.dot_dimension_numbers<[1], [0], [0], [1], [0, 0, 1, 1], [], []>} : vector<2x32xf32>, vector<32x128xf32>, vector<2x128xf32> -> vector<2x128xf32>
    %cst_41 = arith.constant dense<0.000000e+00> : vector<2x128xf32>
    %179 = tpu.matmul %158, %2, %cst_41 {dimension_numbers = #tpu.dot_dimension_numbers<[1], [0], [0], [1], [0, 0, 1, 1], [], []>} : vector<2x32xf32>, vector<32x128xf32>, vector<2x128xf32> -> vector<2x128xf32>
    %180 = arith.addf %178, %179 : vector<2x128xf32>
    %181 = arith.addf %180, %5 : vector<2x128xf32>
    %182 = arith.negf %181 : vector<2x128xf32>
    %183 = math.exp %182 : vector<2x128xf32>
    %cst_42 = arith.constant 1.000000e+00 : f32
    %184 = vector.broadcast %cst_42 : f32 to vector<2x128xf32>
    %185 = arith.addf %184, %183 : vector<2x128xf32>
    %186 = arith.divf %184, %185 : vector<2x128xf32>
    %187 = math.tanh %181 : vector<2x128xf32>
    %188 = vector.extract_strided_slice %186 {offsets = [0, 0], sizes = [2, 32], strides = [1, 1]} : vector<2x128xf32> to vector<2x32xf32>
    %189 = vector.extract_strided_slice %186 {offsets = [0, 32], sizes = [2, 32], strides = [1, 1]} : vector<2x128xf32> to vector<2x32xf32>
    %190 = vector.extract_strided_slice %187 {offsets = [0, 64], sizes = [2, 32], strides = [1, 1]} : vector<2x128xf32> to vector<2x32xf32>
    %191 = vector.extract_strided_slice %186 {offsets = [0, 96], sizes = [2, 32], strides = [1, 1]} : vector<2x128xf32> to vector<2x32xf32>
    %192 = arith.mulf %189, %156 : vector<2x32xf32>
    %193 = arith.mulf %188, %190 : vector<2x32xf32>
    %194 = arith.addf %192, %193 : vector<2x32xf32>
    %195 = math.tanh %194 : vector<2x32xf32>
    %196 = arith.mulf %191, %195 : vector<2x32xf32>
    %c5 = arith.constant 5 : index
    %c0_43 = arith.constant 0 : index
    %c0_44 = arith.constant 0 : index
    %197 = vector.load %arg0[%c5, %c0_43, %c0_44] : memref<8x2x128xf32, #tpu.memory_space<vmem>>, vector<1x2x128xf32>
    %198 = vector.shape_cast %197 : vector<1x2x128xf32> to vector<2x128xf32>
    %cst_45 = arith.constant dense<0.000000e+00> : vector<2x128xf32>
    %199 = tpu.matmul %177, %0, %cst_45 {dimension_numbers = #tpu.dot_dimension_numbers<[1], [0], [0], [1], [0, 0, 1, 1], [], []>} : vector<2x32xf32>, vector<32x128xf32>, vector<2x128xf32> -> vector<2x128xf32>
    %200 = arith.addf %198, %199 : vector<2x128xf32>
    %201 = arith.negf %200 : vector<2x128xf32>
    %202 = math.exp %201 : vector<2x128xf32>
    %cst_46 = arith.constant 1.000000e+00 : f32
    %203 = vector.broadcast %cst_46 : f32 to vector<2x128xf32>
    %204 = arith.addf %203, %202 : vector<2x128xf32>
    %205 = arith.divf %203, %204 : vector<2x128xf32>
    %206 = math.tanh %200 : vector<2x128xf32>
    %207 = vector.extract_strided_slice %205 {offsets = [0, 0], sizes = [2, 32], strides = [1, 1]} : vector<2x128xf32> to vector<2x32xf32>
    %208 = vector.extract_strided_slice %205 {offsets = [0, 32], sizes = [2, 32], strides = [1, 1]} : vector<2x128xf32> to vector<2x32xf32>
    %209 = vector.extract_strided_slice %206 {offsets = [0, 64], sizes = [2, 32], strides = [1, 1]} : vector<2x128xf32> to vector<2x32xf32>
    %210 = vector.extract_strided_slice %205 {offsets = [0, 96], sizes = [2, 32], strides = [1, 1]} : vector<2x128xf32> to vector<2x32xf32>
    %211 = arith.mulf %208, %175 : vector<2x32xf32>
    %212 = arith.mulf %207, %209 : vector<2x32xf32>
    %213 = arith.addf %211, %212 : vector<2x32xf32>
    %214 = math.tanh %213 : vector<2x32xf32>
    %215 = arith.mulf %210, %214 : vector<2x32xf32>
    %cst_47 = arith.constant dense<0.000000e+00> : vector<2x128xf32>
    %216 = tpu.matmul %215, %1, %cst_47 {dimension_numbers = #tpu.dot_dimension_numbers<[1], [0], [0], [1], [0, 0, 1, 1], [], []>} : vector<2x32xf32>, vector<32x128xf32>, vector<2x128xf32> -> vector<2x128xf32>
    %cst_48 = arith.constant dense<0.000000e+00> : vector<2x128xf32>
    %217 = tpu.matmul %196, %2, %cst_48 {dimension_numbers = #tpu.dot_dimension_numbers<[1], [0], [0], [1], [0, 0, 1, 1], [], []>} : vector<2x32xf32>, vector<32x128xf32>, vector<2x128xf32> -> vector<2x128xf32>
    %218 = arith.addf %216, %217 : vector<2x128xf32>
    %219 = arith.addf %218, %5 : vector<2x128xf32>
    %220 = arith.negf %219 : vector<2x128xf32>
    %221 = math.exp %220 : vector<2x128xf32>
    %cst_49 = arith.constant 1.000000e+00 : f32
    %222 = vector.broadcast %cst_49 : f32 to vector<2x128xf32>
    %223 = arith.addf %222, %221 : vector<2x128xf32>
    %224 = arith.divf %222, %223 : vector<2x128xf32>
    %225 = math.tanh %219 : vector<2x128xf32>
    %226 = vector.extract_strided_slice %224 {offsets = [0, 0], sizes = [2, 32], strides = [1, 1]} : vector<2x128xf32> to vector<2x32xf32>
    %227 = vector.extract_strided_slice %224 {offsets = [0, 32], sizes = [2, 32], strides = [1, 1]} : vector<2x128xf32> to vector<2x32xf32>
    %228 = vector.extract_strided_slice %225 {offsets = [0, 64], sizes = [2, 32], strides = [1, 1]} : vector<2x128xf32> to vector<2x32xf32>
    %229 = vector.extract_strided_slice %224 {offsets = [0, 96], sizes = [2, 32], strides = [1, 1]} : vector<2x128xf32> to vector<2x32xf32>
    %230 = arith.mulf %227, %194 : vector<2x32xf32>
    %231 = arith.mulf %226, %228 : vector<2x32xf32>
    %232 = arith.addf %230, %231 : vector<2x32xf32>
    %233 = math.tanh %232 : vector<2x32xf32>
    %234 = arith.mulf %229, %233 : vector<2x32xf32>
    %c6 = arith.constant 6 : index
    %c0_50 = arith.constant 0 : index
    %c0_51 = arith.constant 0 : index
    %235 = vector.load %arg0[%c6, %c0_50, %c0_51] : memref<8x2x128xf32, #tpu.memory_space<vmem>>, vector<1x2x128xf32>
    %236 = vector.shape_cast %235 : vector<1x2x128xf32> to vector<2x128xf32>
    %cst_52 = arith.constant dense<0.000000e+00> : vector<2x128xf32>
    %237 = tpu.matmul %215, %0, %cst_52 {dimension_numbers = #tpu.dot_dimension_numbers<[1], [0], [0], [1], [0, 0, 1, 1], [], []>} : vector<2x32xf32>, vector<32x128xf32>, vector<2x128xf32> -> vector<2x128xf32>
    %238 = arith.addf %236, %237 : vector<2x128xf32>
    %239 = arith.negf %238 : vector<2x128xf32>
    %240 = math.exp %239 : vector<2x128xf32>
    %cst_53 = arith.constant 1.000000e+00 : f32
    %241 = vector.broadcast %cst_53 : f32 to vector<2x128xf32>
    %242 = arith.addf %241, %240 : vector<2x128xf32>
    %243 = arith.divf %241, %242 : vector<2x128xf32>
    %244 = math.tanh %238 : vector<2x128xf32>
    %245 = vector.extract_strided_slice %243 {offsets = [0, 0], sizes = [2, 32], strides = [1, 1]} : vector<2x128xf32> to vector<2x32xf32>
    %246 = vector.extract_strided_slice %243 {offsets = [0, 32], sizes = [2, 32], strides = [1, 1]} : vector<2x128xf32> to vector<2x32xf32>
    %247 = vector.extract_strided_slice %244 {offsets = [0, 64], sizes = [2, 32], strides = [1, 1]} : vector<2x128xf32> to vector<2x32xf32>
    %248 = vector.extract_strided_slice %243 {offsets = [0, 96], sizes = [2, 32], strides = [1, 1]} : vector<2x128xf32> to vector<2x32xf32>
    %249 = arith.mulf %246, %213 : vector<2x32xf32>
    %250 = arith.mulf %245, %247 : vector<2x32xf32>
    %251 = arith.addf %249, %250 : vector<2x32xf32>
    %252 = math.tanh %251 : vector<2x32xf32>
    %253 = arith.mulf %248, %252 : vector<2x32xf32>
    %cst_54 = arith.constant dense<0.000000e+00> : vector<2x128xf32>
    %254 = tpu.matmul %253, %1, %cst_54 {dimension_numbers = #tpu.dot_dimension_numbers<[1], [0], [0], [1], [0, 0, 1, 1], [], []>} : vector<2x32xf32>, vector<32x128xf32>, vector<2x128xf32> -> vector<2x128xf32>
    %cst_55 = arith.constant dense<0.000000e+00> : vector<2x128xf32>
    %255 = tpu.matmul %234, %2, %cst_55 {dimension_numbers = #tpu.dot_dimension_numbers<[1], [0], [0], [1], [0, 0, 1, 1], [], []>} : vector<2x32xf32>, vector<32x128xf32>, vector<2x128xf32> -> vector<2x128xf32>
    %256 = arith.addf %254, %255 : vector<2x128xf32>
    %257 = arith.addf %256, %5 : vector<2x128xf32>
    %258 = arith.negf %257 : vector<2x128xf32>
    %259 = math.exp %258 : vector<2x128xf32>
    %cst_56 = arith.constant 1.000000e+00 : f32
    %260 = vector.broadcast %cst_56 : f32 to vector<2x128xf32>
    %261 = arith.addf %260, %259 : vector<2x128xf32>
    %262 = arith.divf %260, %261 : vector<2x128xf32>
    %263 = math.tanh %257 : vector<2x128xf32>
    %264 = vector.extract_strided_slice %262 {offsets = [0, 0], sizes = [2, 32], strides = [1, 1]} : vector<2x128xf32> to vector<2x32xf32>
    %265 = vector.extract_strided_slice %262 {offsets = [0, 32], sizes = [2, 32], strides = [1, 1]} : vector<2x128xf32> to vector<2x32xf32>
    %266 = vector.extract_strided_slice %263 {offsets = [0, 64], sizes = [2, 32], strides = [1, 1]} : vector<2x128xf32> to vector<2x32xf32>
    %267 = vector.extract_strided_slice %262 {offsets = [0, 96], sizes = [2, 32], strides = [1, 1]} : vector<2x128xf32> to vector<2x32xf32>
    %268 = arith.mulf %265, %232 : vector<2x32xf32>
    %269 = arith.mulf %264, %266 : vector<2x32xf32>
    %270 = arith.addf %268, %269 : vector<2x32xf32>
    %271 = math.tanh %270 : vector<2x32xf32>
    %272 = arith.mulf %267, %271 : vector<2x32xf32>
    %c7 = arith.constant 7 : index
    %c0_57 = arith.constant 0 : index
    %c0_58 = arith.constant 0 : index
    %273 = vector.load %arg0[%c7, %c0_57, %c0_58] : memref<8x2x128xf32, #tpu.memory_space<vmem>>, vector<1x2x128xf32>
    %274 = vector.shape_cast %273 : vector<1x2x128xf32> to vector<2x128xf32>
    %cst_59 = arith.constant dense<0.000000e+00> : vector<2x128xf32>
    %275 = tpu.matmul %253, %0, %cst_59 {dimension_numbers = #tpu.dot_dimension_numbers<[1], [0], [0], [1], [0, 0, 1, 1], [], []>} : vector<2x32xf32>, vector<32x128xf32>, vector<2x128xf32> -> vector<2x128xf32>
    %276 = arith.addf %274, %275 : vector<2x128xf32>
    %277 = arith.negf %276 : vector<2x128xf32>
    %278 = math.exp %277 : vector<2x128xf32>
    %cst_60 = arith.constant 1.000000e+00 : f32
    %279 = vector.broadcast %cst_60 : f32 to vector<2x128xf32>
    %280 = arith.addf %279, %278 : vector<2x128xf32>
    %281 = arith.divf %279, %280 : vector<2x128xf32>
    %282 = math.tanh %276 : vector<2x128xf32>
    %283 = vector.extract_strided_slice %281 {offsets = [0, 0], sizes = [2, 32], strides = [1, 1]} : vector<2x128xf32> to vector<2x32xf32>
    %284 = vector.extract_strided_slice %281 {offsets = [0, 32], sizes = [2, 32], strides = [1, 1]} : vector<2x128xf32> to vector<2x32xf32>
    %285 = vector.extract_strided_slice %282 {offsets = [0, 64], sizes = [2, 32], strides = [1, 1]} : vector<2x128xf32> to vector<2x32xf32>
    %286 = vector.extract_strided_slice %281 {offsets = [0, 96], sizes = [2, 32], strides = [1, 1]} : vector<2x128xf32> to vector<2x32xf32>
    %287 = arith.mulf %284, %251 : vector<2x32xf32>
    %288 = arith.mulf %283, %285 : vector<2x32xf32>
    %289 = arith.addf %287, %288 : vector<2x32xf32>
    %290 = math.tanh %289 : vector<2x32xf32>
    %291 = arith.mulf %286, %290 : vector<2x32xf32>
    %cst_61 = arith.constant dense<0.000000e+00> : vector<2x128xf32>
    %292 = tpu.matmul %291, %1, %cst_61 {dimension_numbers = #tpu.dot_dimension_numbers<[1], [0], [0], [1], [0, 0, 1, 1], [], []>} : vector<2x32xf32>, vector<32x128xf32>, vector<2x128xf32> -> vector<2x128xf32>
    %cst_62 = arith.constant dense<0.000000e+00> : vector<2x128xf32>
    %293 = tpu.matmul %272, %2, %cst_62 {dimension_numbers = #tpu.dot_dimension_numbers<[1], [0], [0], [1], [0, 0, 1, 1], [], []>} : vector<2x32xf32>, vector<32x128xf32>, vector<2x128xf32> -> vector<2x128xf32>
    %294 = arith.addf %292, %293 : vector<2x128xf32>
    %295 = arith.addf %294, %5 : vector<2x128xf32>
    %296 = arith.negf %295 : vector<2x128xf32>
    %297 = math.exp %296 : vector<2x128xf32>
    %cst_63 = arith.constant 1.000000e+00 : f32
    %298 = vector.broadcast %cst_63 : f32 to vector<2x128xf32>
    %299 = arith.addf %298, %297 : vector<2x128xf32>
    %300 = arith.divf %298, %299 : vector<2x128xf32>
    %301 = math.tanh %295 : vector<2x128xf32>
    %302 = vector.extract_strided_slice %300 {offsets = [0, 0], sizes = [2, 32], strides = [1, 1]} : vector<2x128xf32> to vector<2x32xf32>
    %303 = vector.extract_strided_slice %300 {offsets = [0, 32], sizes = [2, 32], strides = [1, 1]} : vector<2x128xf32> to vector<2x32xf32>
    %304 = vector.extract_strided_slice %301 {offsets = [0, 64], sizes = [2, 32], strides = [1, 1]} : vector<2x128xf32> to vector<2x32xf32>
    %305 = vector.extract_strided_slice %300 {offsets = [0, 96], sizes = [2, 32], strides = [1, 1]} : vector<2x128xf32> to vector<2x32xf32>
    %306 = arith.mulf %303, %270 : vector<2x32xf32>
    %307 = arith.mulf %302, %304 : vector<2x32xf32>
    %308 = arith.addf %306, %307 : vector<2x32xf32>
    %309 = math.tanh %308 : vector<2x32xf32>
    %310 = arith.mulf %305, %309 : vector<2x32xf32>
    %c0_64 = arith.constant 0 : index
    %c0_65 = arith.constant 0 : index
    %311 = vector.load %arg6[%c0_64, %c0_65] : memref<32x32xf32, #tpu.memory_space<vmem>>, vector<32x32xf32>
    %cst_66 = arith.constant dense<0.000000e+00> : vector<2x32xf32>
    %312 = tpu.matmul %310, %311, %cst_66 {dimension_numbers = #tpu.dot_dimension_numbers<[1], [0], [0], [1], [0, 0, 1, 1], [], []>} : vector<2x32xf32>, vector<32x32xf32>, vector<2x32xf32> -> vector<2x32xf32>
    %c0_67 = arith.constant 0 : index
    %c0_68 = arith.constant 0 : index
    %313 = vector.load %arg5[%c0_67, %c0_68] : memref<2x8xf32, #tpu.memory_space<vmem>>, vector<2x8xf32>
    %c0_69 = arith.constant 0 : index
    %c0_70 = arith.constant 0 : index
    %314 = vector.load %arg7[%c0_69, %c0_70] : memref<8x32xf32, #tpu.memory_space<vmem>>, vector<8x32xf32>
    %cst_71 = arith.constant dense<0.000000e+00> : vector<2x32xf32>
    %315 = tpu.matmul %313, %314, %cst_71 {dimension_numbers = #tpu.dot_dimension_numbers<[1], [0], [0], [1], [0, 0, 1, 1], [], []>} : vector<2x8xf32>, vector<8x32xf32>, vector<2x32xf32> -> vector<2x32xf32>
    %316 = arith.addf %312, %315 : vector<2x32xf32>
    %c0_72 = arith.constant 0 : index
    %c0_73 = arith.constant 0 : index
    %317 = vector.load %arg8[%c0_72, %c0_73] : memref<1x32xf32, #tpu.memory_space<vmem>>, vector<1x32xf32>
    %318 = vector.broadcast %317 : vector<1x32xf32> to vector<2x32xf32>
    %319 = arith.addf %316, %318 : vector<2x32xf32>
    %cst_74 = arith.constant 0.000000e+00 : f32
    %320 = vector.broadcast %cst_74 : f32 to vector<2x32xf32>
    %321 = arith.maximumf %319, %320 : vector<2x32xf32>
    %c0_75 = arith.constant 0 : index
    %c0_76 = arith.constant 0 : index
    %322 = vector.load %arg9[%c0_75, %c0_76] : memref<32x32xf32, #tpu.memory_space<vmem>>, vector<32x32xf32>
    %cst_77 = arith.constant dense<0.000000e+00> : vector<2x32xf32>
    %323 = tpu.matmul %321, %322, %cst_77 {dimension_numbers = #tpu.dot_dimension_numbers<[1], [0], [0], [1], [0, 0, 1, 1], [], []>} : vector<2x32xf32>, vector<32x32xf32>, vector<2x32xf32> -> vector<2x32xf32>
    %c0_78 = arith.constant 0 : index
    %c0_79 = arith.constant 0 : index
    %324 = vector.load %arg10[%c0_78, %c0_79] : memref<1x32xf32, #tpu.memory_space<vmem>>, vector<1x32xf32>
    %325 = vector.broadcast %324 : vector<1x32xf32> to vector<2x32xf32>
    %326 = arith.addf %323, %325 : vector<2x32xf32>
    %cst_80 = arith.constant 0.000000e+00 : f32
    %327 = vector.broadcast %cst_80 : f32 to vector<2x32xf32>
    %328 = arith.maximumf %326, %327 : vector<2x32xf32>
    %c0_81 = arith.constant 0 : index
    %c0_82 = arith.constant 0 : index
    %329 = vector.load %arg11[%c0_81, %c0_82] : memref<32x3xf32, #tpu.memory_space<vmem>>, vector<32x3xf32>
    %cst_83 = arith.constant dense<0.000000e+00> : vector<2x3xf32>
    %330 = tpu.matmul %328, %329, %cst_83 {dimension_numbers = #tpu.dot_dimension_numbers<[1], [0], [0], [1], [0, 0, 1, 1], [], []>} : vector<2x32xf32>, vector<32x3xf32>, vector<2x3xf32> -> vector<2x3xf32>
    %c0_84 = arith.constant 0 : index
    %c0_85 = arith.constant 0 : index
    %331 = vector.load %arg12[%c0_84, %c0_85] : memref<1x3xf32, #tpu.memory_space<vmem>>, vector<1x3xf32>
    %332 = vector.broadcast %331 : vector<1x3xf32> to vector<2x3xf32>
    %333 = arith.addf %330, %332 : vector<2x3xf32>
    %c0_86 = arith.constant 0 : index
    %c0_87 = arith.constant 0 : index
    %334 = vector.load %arg13[%c0_86, %c0_87] : memref<2x3xf32, #tpu.memory_space<vmem>>, vector<2x3xf32>
    tpu.vector_store %arg13[%c0_86, %c0_87], %333 {strides = array<i32>} : memref<2x3xf32, #tpu.memory_space<vmem>>, vector<2x3xf32>,
    %c0_88 = arith.constant 0 : index
    %c0_89 = arith.constant 0 : index
    %c0_90 = arith.constant 0 : index
    %335 = vector.load %arg14[%c0_88, %c0_89, %c0_90] : memref<2x2x32xf32, #tpu.memory_space<vmem>>, vector<1x2x32xf32>
    %336 = vector.shape_cast %335 : vector<1x2x32xf32> to vector<2x32xf32>
    %337 = vector.shape_cast %291 : vector<2x32xf32> to vector<1x2x32xf32>
    tpu.vector_store %arg14[%c0_88, %c0_89, %c0_90], %337 {strides = array<i32>} : memref<2x2x32xf32, #tpu.memory_space<vmem>>, vector<1x2x32xf32>,
    %c1_91 = arith.constant 1 : index
    %c0_92 = arith.constant 0 : index
    %c0_93 = arith.constant 0 : index
    %338 = vector.load %arg14[%c1_91, %c0_92, %c0_93] : memref<2x2x32xf32, #tpu.memory_space<vmem>>, vector<1x2x32xf32>
    %339 = vector.shape_cast %338 : vector<1x2x32xf32> to vector<2x32xf32>
    %340 = vector.shape_cast %310 : vector<2x32xf32> to vector<1x2x32xf32>
    tpu.vector_store %arg14[%c1_91, %c0_92, %c0_93], %340 {strides = array<i32>} : memref<2x2x32xf32, #tpu.memory_space<vmem>>, vector<1x2x32xf32>,
    %c0_94 = arith.constant 0 : index
    %c0_95 = arith.constant 0 : index
    %c0_96 = arith.constant 0 : index
    %341 = vector.load %arg15[%c0_94, %c0_95, %c0_96] : memref<2x2x32xf32, #tpu.memory_space<vmem>>, vector<1x2x32xf32>
    %342 = vector.shape_cast %341 : vector<1x2x32xf32> to vector<2x32xf32>
    %343 = vector.shape_cast %289 : vector<2x32xf32> to vector<1x2x32xf32>
    tpu.vector_store %arg15[%c0_94, %c0_95, %c0_96], %343 {strides = array<i32>} : memref<2x2x32xf32, #tpu.memory_space<vmem>>, vector<1x2x32xf32>,
    %c1_97 = arith.constant 1 : index
    %c0_98 = arith.constant 0 : index
    %c0_99 = arith.constant 0 : index
    %344 = vector.load %arg15[%c1_97, %c0_98, %c0_99] : memref<2x2x32xf32, #tpu.memory_space<vmem>>, vector<1x2x32xf32>
    %345 = vector.shape_cast %344 : vector<1x2x32xf32> to vector<2x32xf32>
    %346 = vector.shape_cast %308 : vector<2x32xf32> to vector<1x2x32xf32>
    tpu.vector_store %arg15[%c1_97, %c0_98, %c0_99], %346 {strides = array<i32>} : memref<2x2x32xf32, #tpu.memory_space<vmem>>, vector<1x2x32xf32>,
    return
  }
}

</mosaic_0001>

<llo_original>
// kernel: network2_forward.1
$region0: #{network2_forward.1}
  #allocation0 [shape = 'u32[]', space=smem, size = 0x4, offset = 0x4, fixed_abs, tag = 'smem constant byte address 0x4 - core index']
  #allocation1 [shape = 'u32[72,128]{1,0:T(1,128)}', space=vmem, size = 0x9000, scoped, tag = 'internal scratch']
  %s0 = inlined_call_operand.vmem [shape: f32[8,2,128], index: 0, kind: input, shape index: {}]
  %s1 = inlined_call_operand.vmem [shape: f32[32,128], index: 1, kind: input, shape index: {}]
  %s2 = inlined_call_operand.vmem [shape: f32[32,128], index: 2, kind: input, shape index: {}]
  %s3 = inlined_call_operand.vmem [shape: f32[32,128], index: 3, kind: input, shape index: {}]
  %s4 = inlined_call_operand.vmem [shape: f32[1,128], index: 4, kind: input, shape index: {}]
  %s5 = inlined_call_operand.vmem [shape: f32[2,8], index: 5, kind: input, shape index: {}]
  %s6 = inlined_call_operand.vmem [shape: f32[32,32], index: 6, kind: input, shape index: {}]
  %s7 = inlined_call_operand.vmem [shape: f32[8,32], index: 7, kind: input, shape index: {}]
  %s8 = inlined_call_operand.vmem [shape: f32[1,32], index: 8, kind: input, shape index: {}]
  %s9 = inlined_call_operand.vmem [shape: f32[32,32], index: 9, kind: input, shape index: {}]
  %s10 = inlined_call_operand.vmem [shape: f32[1,32], index: 10, kind: input, shape index: {}]
  %s11 = inlined_call_operand.vmem [shape: f32[32,3], index: 11, kind: input, shape index: {}]
  %s12 = inlined_call_operand.vmem [shape: f32[1,3], index: 12, kind: input, shape index: {}]
  %s13 = inlined_call_operand.hbm [shape: f32[2,3], index: 13, kind: output, shape index: {0}]
  %s14 = inlined_call_operand.hbm [shape: f32[2,2,32], index: 14, kind: output, shape index: {1}]
  %s15 = inlined_call_operand.hbm [shape: f32[2,2,32], index: 15, kind: output, shape index: {2}]
  %16 = xla_tuple %s13, %s14, %s15
  %s17 = sld [smem:[#allocation0]]
  $region78: #{network2_forward.1} parent=0
    _
  %s19 = ssub.s32 1, %s17
  %s20 = scalar_select 0, %s19, %s17
  $region1: #{network2_forward.1} parent=0
    #allocation2 [shape = 'u8[1024]{0}', space=vmem, size = 0x400, scoped, tag = 'output window, operand 0, single buffered']
    #allocation3 [shape = 's32[1]{0}', space=sflag, size = 0x4, scoped, tag = 'scoped memory for network2_forward.1']
    #allocation4 [shape = 'u8[2048]{0}', space=vmem, size = 0x800, scoped, tag = 'output window, operand 1, single buffered']
    #allocation5 [shape = 's32[1]{0}', space=sflag, size = 0x4, scoped, tag = 'scoped memory for network2_forward.1']
    #allocation6 [shape = 'u8[2048]{0}', space=vmem, size = 0x800, scoped, tag = 'output window, operand 2, single buffered']
    %21 = vsyncpa [#allocation3], 0
    %22 = vsyncpa [#allocation5], 0
    // Predicated region
    $region2: #{network2_forward.1} parent=1 // pred_check
      _
    $region3: #{network2_forward.1} parent=1 // pred_check_branch
      %24 = sbr.rel (0) target = $region5
    $region4: #{network2_forward.1} parent=1 // pred_region
      _
    $region5: #{network2_forward.1} parent=1 // pred_fallthru
      _
    // Predicated region
    $region6: #{network2_forward.1} parent=1 // pred_check
      _
    $region7: #{network2_forward.1} parent=1 // pred_check_branch
      %26 = sbr.rel (0) target = $region9
    $region8: #{network2_forward.1} parent=1 // pred_region
      _
    $region9: #{network2_forward.1} parent=1 // pred_fallthru
      _
    // Predicated region
    $region10: #{network2_forward.1} parent=1 // pred_check
      _
    $region11: #{network2_forward.1} parent=1 // pred_check_branch
      %28 = sbr.rel (0) target = $region13
    $region12: #{network2_forward.1} parent=1 // pred_region
      _
    $region13: #{network2_forward.1} parent=1 // pred_fallthru
      _
    // Predicated region
    $region14: #{network2_forward.1} parent=1 // pred_check
      _
    $region15: #{network2_forward.1} parent=1 // pred_check_branch
      %30 = sbr.rel (0) target = $region17
    $region16: #{network2_forward.1} parent=1 // pred_region
      _
    $region17: #{network2_forward.1} parent=1 // pred_fallthru
      _
    // Predicated region
    $region18: #{network2_forward.1} parent=1 // pred_check
      _
    $region19: #{network2_forward.1} parent=1 // pred_check_branch
      %32 = sbr.rel (0) target = $region21
    $region20: #{network2_forward.1} parent=1 // pred_region
      _
    $region21: #{network2_forward.1} parent=1 // pred_fallthru
      _
    // Predicated region
    $region22: #{network2_forward.1} parent=1 // pred_check
      _
    $region23: #{network2_forward.1} parent=1 // pred_check_branch
      %34 = sbr.rel (0) target = $region25
    $region24: #{network2_forward.1} parent=1 // pred_region
      _
    $region25: #{network2_forward.1} parent=1 // pred_fallthru
      _
    // Predicated region
    $region26: #{network2_forward.1} parent=1 // pred_check
      _
    $region27: #{network2_forward.1} parent=1 // pred_check_branch
      %36 = sbr.rel (0) target = $region29
    $region28: #{network2_forward.1} parent=1 // pred_region
      _
    $region29: #{network2_forward.1} parent=1 // pred_fallthru
      _
    // Predicated region
    $region30: #{network2_forward.1} parent=1 // pred_check
      _
    $region31: #{network2_forward.1} parent=1 // pred_check_branch
      %38 = sbr.rel (0) target = $region33
    $region32: #{network2_forward.1} parent=1 // pred_region
      _
    $region33: #{network2_forward.1} parent=1 // pred_fallthru
      _
    // Predicated region
    $region34: #{network2_forward.1} parent=1 // pred_check
      _
    $region35: #{network2_forward.1} parent=1 // pred_check_branch
      %40 = sbr.rel (0) target = $region37
    $region36: #{network2_forward.1} parent=1 // pred_region
      _
    $region37: #{network2_forward.1} parent=1 // pred_fallthru
      _
    // Predicated region
    $region38: #{network2_forward.1} parent=1 // pred_check
      _
    $region39: #{network2_forward.1} parent=1 // pred_check_branch
      %42 = sbr.rel (0) target = $region41
    $region40: #{network2_forward.1} parent=1 // pred_region
      _
    $region41: #{network2_forward.1} parent=1 // pred_fallthru
      _
    // Predicated region
    $region42: #{network2_forward.1} parent=1 // pred_check
      _
    $region43: #{network2_forward.1} parent=1 // pred_check_branch
      %44 = sbr.rel (0) target = $region45
    $region44: #{network2_forward.1} parent=1 // pred_region
      _
    $region45: #{network2_forward.1} parent=1 // pred_fallthru
      _
    // Predicated region
    $region46: #{network2_forward.1} parent=1 // pred_check
      _
    $region47: #{network2_forward.1} parent=1 // pred_check_branch
      %46 = sbr.rel (0) target = $region49
    $region48: #{network2_forward.1} parent=1 // pred_region
      _
    $region49: #{network2_forward.1} parent=1 // pred_fallthru
      _
    // Predicated region
    $region50: #{network2_forward.1} parent=1 // pred_check
      _
    $region51: #{network2_forward.1} parent=1 // pred_check_branch
      %48 = sbr.rel (0) target = $region53
    $region52: #{network2_forward.1} parent=1 // pred_region
      _
    $region53: #{network2_forward.1} parent=1 // pred_fallthru
      _
    %v49 = vld [vmem:[%s1] sm:$0xff]
    %v50 = vld [vmem:[%s1 + $0x8] sm:$0xff]
    %v51 = vld [vmem:[%s1 + $0x10] sm:$0xff]
    %v52 = vld [vmem:[%s1 + $0x18] sm:$0xff]
    %v53 = vld [vmem:[%s2] sm:$0xff]
    %v54 = vld [vmem:[%s2 + $0x8] sm:$0xff]
    %v55 = vld [vmem:[%s2 + $0x10] sm:$0xff]
    %v56 = vld [vmem:[%s2 + $0x18] sm:$0xff]
    %v57 = vld [vmem:[%s3] sm:$0xff]
    %v58 = vld [vmem:[%s3 + $0x8] sm:$0xff]
    %v59 = vld [vmem:[%s3 + $0x10] sm:$0xff]
    %v60 = vld [vmem:[%s3 + $0x18] sm:$0xff]
    %v61 = vld [vmem:[%s4] sm:$0x1]
    %v63 = vperm.slane %v61, 0
    %v65 = vld [vmem:[%s0] sm:$0x3]
    %vm66 = vcmask 261120
    %v68 = vsel %vm66, 0.0, 0
    %70 = vmatpush.msra.mxu0 0.0
    %71 = vmatpush.msra.mxu0 0.0
    %72 = vmatpush.msra.mxu0 0.0
    %73 = vmatpush.msra.mxu0 0.0
    %74 = vmatpush.msra.mxu0 0.0
    %75 = vmatpush.msra.mxu0 0.0
    %76 = vmatpush.msra.mxu0 0.0
    %77 = vmatpush.msra.mxu0 0.0
    %78 = vmatpush.msra.mxu0 0.0
    %79 = vmatpush.msra.mxu0 0.0
    %80 = vmatpush.msra.mxu0 0.0
    %81 = vmatpush.msra.mxu0 0.0
    %82 = vmatpush.msra.mxu0 %v52
    %83 = vmatpush.msra.mxu0 %v51
    %84 = vmatpush.msra.mxu0 %v50
    %85 = vmatpush.msra.mxu0 %v49
    %86 = vmatmul.f32.gmra.mxu0 %v68
    %v87 = vpop.f32.mrf.mxu0
    %v88 = vadd.f32 0.0, %v87
    %89 = vdwg.mxu0
    %v90 = vadd.f32 %v65, %v88
    %v91 = vxor.u32 %v90, 2147483648
    %v92 = vmul.f32 %v91, 1.442695
    %v93 = vpow.pop %v92
    %v94 = vadd.f32 %v93, 1.0
    %v95 = vrcp.pop %v94
    %v96 = vmul.f32 %v94, %v95
    %v97 = vsub.f32 1.0, %v96
    %v98 = vmul.f32 %v95, %v97
    %v99 = vadd.f32 %v95, %v98
    %vm100 = vweird.f32 %v94
    %vm101 = vweird.f32 %v95
    %vm102 = vmor %vm100, %vm101
    %v103 = vsel %vm102, %v95, %v99
    %v104 = vand.u32 2147483647, %v94
    %vm105 = vcmp.eq.f32.partialorder %v104, 8.507059e+37
    %v106 = vand.u32 %v94, 2147483648
    %v107 = vor.u32 1.1754944e-38, %v106
    %v108 = vsel %vm105, %v107, %v103
    %v109 = vmul.f32 1.0, %v108
    %v110 = vtanh.pop %v90
    %v111 = vmul.f32 %v109, 0.0
    %113 = vrot.lane.b32.xlu0 %v110, 64
    %v114 = vpop.permute.xlu0 %113
    %v116 = vmul.f32 %v109, %v114
    %118 = vrot.lane.b32.xlu0 %v116, 32
    %v119 = vpop.permute.xlu0 %118
    %v121 = vadd.f32 %v111, %v119
    %v122 = vtanh.pop %v121
    %124 = vrot.lane.b32.xlu0 %v122, 64
    %v125 = vpop.permute.xlu0 %124
    %v127 = vmul.f32 %v109, %v125
    %128 = vmatpush.msra.mxu0 0.0
    %129 = vmatpush.msra.mxu0 0.0
    %130 = vmatpush.msra.mxu0 0.0
    %131 = vmatpush.msra.mxu0 0.0
    %132 = vmatpush.msra.mxu0 0.0
    %133 = vmatpush.msra.mxu0 0.0
    %134 = vmatpush.msra.mxu0 0.0
    %135 = vmatpush.msra.mxu0 0.0
    %136 = vmatpush.msra.mxu0 0.0
    %137 = vmatpush.msra.mxu0 0.0
    %138 = vmatpush.msra.mxu0 0.0
    %139 = vmatpush.msra.mxu0 0.0
    %140 = vmatpush.msra.mxu0 %v60
    %141 = vmatpush.msra.mxu0 %v59
    %142 = vmatpush.msra.mxu0 %v58
    %143 = vmatpush.msra.mxu0 %v57
    %144 = vmatmul.f32.gmra.mxu0 %v68
    %v145 = vpop.f32.mrf.mxu0
    %v146 = vadd.f32 0.0, %v145
    %147 = vdwg.mxu0
    %149 = vrot.lane.b32.xlu0 %v127, 32
    %v150 = vpop.permute.xlu0 %149
    %v151 = vsel %vm66, %v150, 0
    %153 = vmatpush.msra.mxu0 0.0
    %154 = vmatpush.msra.mxu0 0.0
    %155 = vmatpush.msra.mxu0 0.0
    %156 = vmatpush.msra.mxu0 0.0
    %157 = vmatpush.msra.mxu0 0.0
    %158 = vmatpush.msra.mxu0 0.0
    %159 = vmatpush.msra.mxu0 0.0
    %160 = vmatpush.msra.mxu0 0.0
    %161 = vmatpush.msra.mxu0 0.0
    %162 = vmatpush.msra.mxu0 0.0
    %163 = vmatpush.msra.mxu0 0.0
    %164 = vmatpush.msra.mxu0 0.0
    %165 = vmatpush.msra.mxu0 %v56
    %166 = vmatpush.msra.mxu0 %v55
    %167 = vmatpush.msra.mxu0 %v54
    %168 = vmatpush.msra.mxu0 %v53
    %169 = vmatmul.f32.gmra.mxu0 %v151
    %v170 = vpop.f32.mrf.mxu0
    %v171 = vadd.f32 %v146, %v170
    %172 = vdwg.mxu0
    %v173 = vadd.f32 %v171, %v63
    %v174 = vxor.u32 %v173, 2147483648
    %v175 = vmul.f32 %v174, 1.442695
    %v176 = vpow.pop %v175
    %v177 = vadd.f32 %v176, 1.0
    %v178 = vrcp.pop %v177
    %v179 = vmul.f32 %v177, %v178
    %v180 = vsub.f32 1.0, %v179
    %v181 = vmul.f32 %v178, %v180
    %v182 = vadd.f32 %v178, %v181
    %vm183 = vweird.f32 %v177
    %vm184 = vweird.f32 %v178
    %vm185 = vmor %vm183, %vm184
    %v186 = vsel %vm185, %v178, %v182
    %v187 = vand.u32 2147483647, %v177
    %vm188 = vcmp.eq.f32.partialorder %v187, 8.507059e+37
    %v189 = vand.u32 %v177, 2147483648
    %v190 = vor.u32 1.1754944e-38, %v189
    %v191 = vsel %vm188, %v190, %v186
    %v192 = vmul.f32 1.0, %v191
    %v193 = vtanh.pop %v173
    %v194 = vmul.f32 %v192, 0.0
    %196 = vrot.lane.b32.xlu0 %v193, 64
    %v197 = vpop.permute.xlu0 %196
    %v199 = vmul.f32 %v192, %v197
    %201 = vrot.lane.b32.xlu0 %v199, 32
    %v202 = vpop.permute.xlu0 %201
    %v204 = vadd.f32 %v194, %v202
    %v205 = vtanh.pop %v204
    %207 = vrot.lane.b32.xlu0 %v205, 64
    %v208 = vpop.permute.xlu0 %207
    %v210 = vmul.f32 %v192, %v208
    %s211 = scalar_lea.vmem %s0, 2
    %v212 = vld [vmem:[%s211] sm:$0x3]
    %213 = vmatpush.msra.mxu0 0.0
    %214 = vmatpush.msra.mxu0 0.0
    %215 = vmatpush.msra.mxu0 0.0
    %216 = vmatpush.msra.mxu0 0.0
    %217 = vmatpush.msra.mxu0 0.0
    %218 = vmatpush.msra.mxu0 0.0
    %219 = vmatpush.msra.mxu0 0.0
    %220 = vmatpush.msra.mxu0 0.0
    %221 = vmatpush.msra.mxu0 0.0
    %222 = vmatpush.msra.mxu0 0.0
    %223 = vmatpush.msra.mxu0 0.0
    %224 = vmatpush.msra.mxu0 0.0
    %225 = vmatpush.msra.mxu0 %v52
    %226 = vmatpush.msra.mxu0 %v51
    %227 = vmatpush.msra.mxu0 %v50
    %228 = vmatpush.msra.mxu0 %v49
    %229 = vmatmul.f32.gmra.mxu0 %v151
    %v230 = vpop.f32.mrf.mxu0
    %v231 = vadd.f32 0.0, %v230
    %232 = vdwg.mxu0
    %v233 = vadd.f32 %v212, %v231
    %v234 = vxor.u32 %v233, 2147483648
    %v235 = vmul.f32 %v234, 1.442695
    %v236 = vpow.pop %v235
    %v237 = vadd.f32 %v236, 1.0
    %v238 = vrcp.pop %v237
    %v239 = vmul.f32 %v237, %v238
    %v240 = vsub.f32 1.0, %v239
    %v241 = vmul.f32 %v238, %v240
    %v242 = vadd.f32 %v238, %v241
    %vm243 = vweird.f32 %v237
    %vm244 = vweird.f32 %v238
    %vm245 = vmor %vm243, %vm244
    %v246 = vsel %vm245, %v238, %v242
    %v247 = vand.u32 2147483647, %v237
    %vm248 = vcmp.eq.f32.partialorder %v247, 8.507059e+37
    %v249 = vand.u32 %v237, 2147483648
    %v250 = vor.u32 1.1754944e-38, %v249
    %v251 = vsel %vm248, %v250, %v246
    %v252 = vmul.f32 1.0, %v251
    %v253 = vtanh.pop %v233
    %v254 = vmul.f32 %v252, %v121
    %256 = vrot.lane.b32.xlu0 %v253, 64
    %v257 = vpop.permute.xlu0 %256
    %v259 = vmul.f32 %v252, %v257
    %261 = vrot.lane.b32.xlu0 %v259, 32
    %v262 = vpop.permute.xlu0 %261
    %v264 = vadd.f32 %v254, %v262
    %v265 = vtanh.pop %v264
    %267 = vrot.lane.b32.xlu0 %v265, 64
    %v268 = vpop.permute.xlu0 %267
    %v270 = vmul.f32 %v252, %v268
    %272 = vrot.lane.b32.xlu0 %v210, 32
    %v273 = vpop.permute.xlu0 %272
    %v274 = vsel %vm66, %v273, 0
    %276 = vmatpush.msra.mxu0 0.0
    %277 = vmatpush.msra.mxu0 0.0
    %278 = vmatpush.msra.mxu0 0.0
    %279 = vmatpush.msra.mxu0 0.0
    %280 = vmatpush.msra.mxu0 0.0
    %281 = vmatpush.msra.mxu0 0.0
    %282 = vmatpush.msra.mxu0 0.0
    %283 = vmatpush.msra.mxu0 0.0
    %284 = vmatpush.msra.mxu0 0.0
    %285 = vmatpush.msra.mxu0 0.0
    %286 = vmatpush.msra.mxu0 0.0
    %287 = vmatpush.msra.mxu0 0.0
    %288 = vmatpush.msra.mxu0 %v60
    %289 = vmatpush.msra.mxu0 %v59
    %290 = vmatpush.msra.mxu0 %v58
    %291 = vmatpush.msra.mxu0 %v57
    %292 = vmatmul.f32.gmra.mxu0 %v274
    %v293 = vpop.f32.mrf.mxu0
    %v294 = vadd.f32 0.0, %v293
    %295 = vdwg.mxu0
    %297 = vrot.lane.b32.xlu0 %v270, 32
    %v298 = vpop.permute.xlu0 %297
    %v299 = vsel %vm66, %v298, 0
    %301 = vmatpush.msra.mxu0 0.0
    %302 = vmatpush.msra.mxu0 0.0
    %303 = vmatpush.msra.mxu0 0.0
    %304 = vmatpush.msra.mxu0 0.0
    %305 = vmatpush.msra.mxu0 0.0
    %306 = vmatpush.msra.mxu0 0.0
    %307 = vmatpush.msra.mxu0 0.0
    %308 = vmatpush.msra.mxu0 0.0
    %309 = vmatpush.msra.mxu0 0.0
    %310 = vmatpush.msra.mxu0 0.0
    %311 = vmatpush.msra.mxu0 0.0
    %312 = vmatpush.msra.mxu0 0.0
    %313 = vmatpush.msra.mxu0 %v56
    %314 = vmatpush.msra.mxu0 %v55
    %315 = vmatpush.msra.mxu0 %v54
    %316 = vmatpush.msra.mxu0 %v53
    %317 = vmatmul.f32.gmra.mxu0 %v299
    %v318 = vpop.f32.mrf.mxu0
    %v319 = vadd.f32 %v294, %v318
    %320 = vdwg.mxu0
    %v321 = vadd.f32 %v319, %v63
    %v322 = vxor.u32 %v321, 2147483648
    %v323 = vmul.f32 %v322, 1.442695
    %v324 = vpow.pop %v323
    %v325 = vadd.f32 %v324, 1.0
    %v326 = vrcp.pop %v325
    %v327 = vmul.f32 %v325, %v326
    %v328 = vsub.f32 1.0, %v327
    %v329 = vmul.f32 %v326, %v328
    %v330 = vadd.f32 %v326, %v329
    %vm331 = vweird.f32 %v325
    %vm332 = vweird.f32 %v326
    %vm333 = vmor %vm331, %vm332
    %v334 = vsel %vm333, %v326, %v330
    %v335 = vand.u32 2147483647, %v325
    %vm336 = vcmp.eq.f32.partialorder %v335, 8.507059e+37
    %v337 = vand.u32 %v325, 2147483648
    %v338 = vor.u32 1.1754944e-38, %v337
    %v339 = vsel %vm336, %v338, %v334
    %v340 = vmul.f32 1.0, %v339
    %v341 = vtanh.pop %v321
    %v342 = vmul.f32 %v340, %v204
    %344 = vrot.lane.b32.xlu0 %v341, 64
    %v345 = vpop.permute.xlu0 %344
    %v347 = vmul.f32 %v340, %v345
    %349 = vrot.lane.b32.xlu0 %v347, 32
    %v350 = vpop.permute.xlu0 %349
    %v352 = vadd.f32 %v342, %v350
    %v353 = vtanh.pop %v352
    %355 = vrot.lane.b32.xlu0 %v353, 64
    %v356 = vpop.permute.xlu0 %355
    %v358 = vmul.f32 %v340, %v356
    %s359 = scalar_lea.vmem %s0, 4
    %v360 = vld [vmem:[%s359] sm:$0x3]
    %361 = vmatpush.msra.mxu0 0.0
    %362 = vmatpush.msra.mxu0 0.0
    %363 = vmatpush.msra.mxu0 0.0
    %364 = vmatpush.msra.mxu0 0.0
    %365 = vmatpush.msra.mxu0 0.0
    %366 = vmatpush.msra.mxu0 0.0
    %367 = vmatpush.msra.mxu0 0.0
    %368 = vmatpush.msra.mxu0 0.0
    %369 = vmatpush.msra.mxu0 0.0
    %370 = vmatpush.msra.mxu0 0.0
    %371 = vmatpush.msra.mxu0 0.0
    %372 = vmatpush.msra.mxu0 0.0
    %373 = vmatpush.msra.mxu0 %v52
    %374 = vmatpush.msra.mxu0 %v51
    %375 = vmatpush.msra.mxu0 %v50
    %376 = vmatpush.msra.mxu0 %v49
    %377 = vmatmul.f32.gmra.mxu0 %v299
    %v378 = vpop.f32.mrf.mxu0
    %v379 = vadd.f32 0.0, %v378
    %380 = vdwg.mxu0
    %v381 = vadd.f32 %v360, %v379
    %v382 = vxor.u32 %v381, 2147483648
    %v383 = vmul.f32 %v382, 1.442695
    %v384 = vpow.pop %v383
    %v385 = vadd.f32 %v384, 1.0
    %v386 = vrcp.pop %v385
    %v387 = vmul.f32 %v385, %v386
    %v388 = vsub.f32 1.0, %v387
    %v389 = vmul.f32 %v386, %v388
    %v390 = vadd.f32 %v386, %v389
    %vm391 = vweird.f32 %v385
    %vm392 = vweird.f32 %v386
    %vm393 = vmor %vm391, %vm392
    %v394 = vsel %vm393, %v386, %v390
    %v395 = vand.u32 2147483647, %v385
    %vm396 = vcmp.eq.f32.partialorder %v395, 8.507059e+37
    %v397 = vand.u32 %v385, 2147483648
    %v398 = vor.u32 1.1754944e-38, %v397
    %v399 = vsel %vm396, %v398, %v394
    %v400 = vmul.f32 1.0, %v399
    %v401 = vtanh.pop %v381
    %v402 = vmul.f32 %v400, %v264
    %404 = vrot.lane.b32.xlu0 %v401, 64
    %v405 = vpop.permute.xlu0 %404
    %v407 = vmul.f32 %v400, %v405
    %409 = vrot.lane.b32.xlu0 %v407, 32
    %v410 = vpop.permute.xlu0 %409
    %v412 = vadd.f32 %v402, %v410
    %v413 = vtanh.pop %v412
    %415 = vrot.lane.b32.xlu0 %v413, 64
    %v416 = vpop.permute.xlu0 %415
    %v418 = vmul.f32 %v400, %v416
    %420 = vrot.lane.b32.xlu0 %v358, 32
    %v421 = vpop.permute.xlu0 %420
    %v422 = vsel %vm66, %v421, 0
    %424 = vmatpush.msra.mxu0 0.0
    %425 = vmatpush.msra.mxu0 0.0
    %426 = vmatpush.msra.mxu0 0.0
    %427 = vmatpush.msra.mxu0 0.0
    %428 = vmatpush.msra.mxu0 0.0
    %429 = vmatpush.msra.mxu0 0.0
    %430 = vmatpush.msra.mxu0 0.0
    %431 = vmatpush.msra.mxu0 0.0
    %432 = vmatpush.msra.mxu0 0.0
    %433 = vmatpush.msra.mxu0 0.0
    %434 = vmatpush.msra.mxu0 0.0
    %435 = vmatpush.msra.mxu0 0.0
    %436 = vmatpush.msra.mxu0 %v60
    %437 = vmatpush.msra.mxu0 %v59
    %438 = vmatpush.msra.mxu0 %v58
    %439 = vmatpush.msra.mxu0 %v57
    %440 = vmatmul.f32.gmra.mxu0 %v422
    %v441 = vpop.f32.mrf.mxu0
    %v442 = vadd.f32 0.0, %v441
    %443 = vdwg.mxu0
    %445 = vrot.lane.b32.xlu0 %v418, 32
    %v446 = vpop.permute.xlu0 %445
    %v447 = vsel %vm66, %v446, 0
    %449 = vmatpush.msra.mxu0 0.0
    %450 = vmatpush.msra.mxu0 0.0
    %451 = vmatpush.msra.mxu0 0.0
    %452 = vmatpush.msra.mxu0 0.0
    %453 = vmatpush.msra.mxu0 0.0
    %454 = vmatpush.msra.mxu0 0.0
    %455 = vmatpush.msra.mxu0 0.0
    %456 = vmatpush.msra.mxu0 0.0
    %457 = vmatpush.msra.mxu0 0.0
    %458 = vmatpush.msra.mxu0 0.0
    %459 = vmatpush.msra.mxu0 0.0
    %460 = vmatpush.msra.mxu0 0.0
    %461 = vmatpush.msra.mxu0 %v56
    %462 = vmatpush.msra.mxu0 %v55
    %463 = vmatpush.msra.mxu0 %v54
    %464 = vmatpush.msra.mxu0 %v53
    %465 = vmatmul.f32.gmra.mxu0 %v447
    %v466 = vpop.f32.mrf.mxu0
    %v467 = vadd.f32 %v442, %v466
    %468 = vdwg.mxu0
    %v469 = vadd.f32 %v467, %v63
    %v470 = vxor.u32 %v469, 2147483648
    %v471 = vmul.f32 %v470, 1.442695
    %v472 = vpow.pop %v471
    %v473 = vadd.f32 %v472, 1.0
    %v474 = vrcp.pop %v473
    %v475 = vmul.f32 %v473, %v474
    %v476 = vsub.f32 1.0, %v475
    %v477 = vmul.f32 %v474, %v476
    %v478 = vadd.f32 %v474, %v477
    %vm479 = vweird.f32 %v473
    %vm480 = vweird.f32 %v474
    %vm481 = vmor %vm479, %vm480
    %v482 = vsel %vm481, %v474, %v478
    %v483 = vand.u32 2147483647, %v473
    %vm484 = vcmp.eq.f32.partialorder %v483, 8.507059e+37
    %v485 = vand.u32 %v473, 2147483648
    %v486 = vor.u32 1.1754944e-38, %v485
    %v487 = vsel %vm484, %v486, %v482
    %v488 = vmul.f32 1.0, %v487
    %v489 = vtanh.pop %v469
    %v490 = vmul.f32 %v488, %v352
    %492 = vrot.lane.b32.xlu0 %v489, 64
    %v493 = vpop.permute.xlu0 %492
    %v495 = vmul.f32 %v488, %v493
    %497 = vrot.lane.b32.xlu0 %v495, 32
    %v498 = vpop.permute.xlu0 %497
    %v500 = vadd.f32 %v490, %v498
    %v501 = vtanh.pop %v500
    %503 = vrot.lane.b32.xlu0 %v501, 64
    %v504 = vpop.permute.xlu0 %503
    %v506 = vmul.f32 %v488, %v504
    %s507 = scalar_lea.vmem %s0, 6
    %v508 = vld [vmem:[%s507] sm:$0x3]
    %509 = vmatpush.msra.mxu0 0.0
    %510 = vmatpush.msra.mxu0 0.0
    %511 = vmatpush.msra.mxu0 0.0
    %512 = vmatpush.msra.mxu0 0.0
    %513 = vmatpush.msra.mxu0 0.0
    %514 = vmatpush.msra.mxu0 0.0
    %515 = vmatpush.msra.mxu0 0.0
    %516 = vmatpush.msra.mxu0 0.0
    %517 = vmatpush.msra.mxu0 0.0
    %518 = vmatpush.msra.mxu0 0.0
    %519 = vmatpush.msra.mxu0 0.0
    %520 = vmatpush.msra.mxu0 0.0
    %521 = vmatpush.msra.mxu0 %v52
    %522 = vmatpush.msra.mxu0 %v51
    %523 = vmatpush.msra.mxu0 %v50
    %524 = vmatpush.msra.mxu0 %v49
    %525 = vmatmul.f32.gmra.mxu0 %v447
    %v526 = vpop.f32.mrf.mxu0
    %v527 = vadd.f32 0.0, %v526
    %528 = vdwg.mxu0
    %v529 = vadd.f32 %v508, %v527
    %v530 = vxor.u32 %v529, 2147483648
    %v531 = vmul.f32 %v530, 1.442695
    %v532 = vpow.pop %v531
    %v533 = vadd.f32 %v532, 1.0
    %v534 = vrcp.pop %v533
    %v535 = vmul.f32 %v533, %v534
    %v536 = vsub.f32 1.0, %v535
    %v537 = vmul.f32 %v534, %v536
    %v538 = vadd.f32 %v534, %v537
    %vm539 = vweird.f32 %v533
    %vm540 = vweird.f32 %v534
    %vm541 = vmor %vm539, %vm540
    %v542 = vsel %vm541, %v534, %v538
    %v543 = vand.u32 2147483647, %v533
    %vm544 = vcmp.eq.f32.partialorder %v543, 8.507059e+37
    %v545 = vand.u32 %v533, 2147483648
    %v546 = vor.u32 1.1754944e-38, %v545
    %v547 = vsel %vm544, %v546, %v542
    %v548 = vmul.f32 1.0, %v547
    %v549 = vtanh.pop %v529
    %v550 = vmul.f32 %v548, %v412
    %552 = vrot.lane.b32.xlu0 %v549, 64
    %v553 = vpop.permute.xlu0 %552
    %v555 = vmul.f32 %v548, %v553
    %557 = vrot.lane.b32.xlu0 %v555, 32
    %v558 = vpop.permute.xlu0 %557
    %v560 = vadd.f32 %v550, %v558
    %v561 = vtanh.pop %v560
    %563 = vrot.lane.b32.xlu0 %v561, 64
    %v564 = vpop.permute.xlu0 %563
    %v566 = vmul.f32 %v548, %v564
    %568 = vrot.lane.b32.xlu0 %v506, 32
    %v569 = vpop.permute.xlu0 %568
    %v570 = vsel %vm66, %v569, 0
    %572 = vmatpush.msra.mxu0 0.0
    %573 = vmatpush.msra.mxu0 0.0
    %574 = vmatpush.msra.mxu0 0.0
    %575 = vmatpush.msra.mxu0 0.0
    %576 = vmatpush.msra.mxu0 0.0
    %577 = vmatpush.msra.mxu0 0.0
    %578 = vmatpush.msra.mxu0 0.0
    %579 = vmatpush.msra.mxu0 0.0
    %580 = vmatpush.msra.mxu0 0.0
    %581 = vmatpush.msra.mxu0 0.0
    %582 = vmatpush.msra.mxu0 0.0
    %583 = vmatpush.msra.mxu0 0.0
    %584 = vmatpush.msra.mxu0 %v60
    %585 = vmatpush.msra.mxu0 %v59
    %586 = vmatpush.msra.mxu0 %v58
    %587 = vmatpush.msra.mxu0 %v57
    %588 = vmatmul.f32.gmra.mxu0 %v570
    %v589 = vpop.f32.mrf.mxu0
    %v590 = vadd.f32 0.0, %v589
    %591 = vdwg.mxu0
    %593 = vrot.lane.b32.xlu0 %v566, 32
    %v594 = vpop.permute.xlu0 %593
    %v595 = vsel %vm66, %v594, 0
    %597 = vmatpush.msra.mxu0 0.0
    %598 = vmatpush.msra.mxu0 0.0
    %599 = vmatpush.msra.mxu0 0.0
    %600 = vmatpush.msra.mxu0 0.0
    %601 = vmatpush.msra.mxu0 0.0
    %602 = vmatpush.msra.mxu0 0.0
    %603 = vmatpush.msra.mxu0 0.0
    %604 = vmatpush.msra.mxu0 0.0
    %605 = vmatpush.msra.mxu0 0.0
    %606 = vmatpush.msra.mxu0 0.0
    %607 = vmatpush.msra.mxu0 0.0
    %608 = vmatpush.msra.mxu0 0.0
    %609 = vmatpush.msra.mxu0 %v56
    %610 = vmatpush.msra.mxu0 %v55
    %611 = vmatpush.msra.mxu0 %v54
    %612 = vmatpush.msra.mxu0 %v53
    %613 = vmatmul.f32.gmra.mxu0 %v595
    %v614 = vpop.f32.mrf.mxu0
    %v615 = vadd.f32 %v590, %v614
    %616 = vdwg.mxu0
    %v617 = vadd.f32 %v615, %v63
    %v618 = vxor.u32 %v617, 2147483648
    %v619 = vmul.f32 %v618, 1.442695
    %v620 = vpow.pop %v619
    %v621 = vadd.f32 %v620, 1.0
    %v622 = vrcp.pop %v621
    %v623 = vmul.f32 %v621, %v622
    %v624 = vsub.f32 1.0, %v623
    %v625 = vmul.f32 %v622, %v624
    %v626 = vadd.f32 %v622, %v625
    %vm627 = vweird.f32 %v621
    %vm628 = vweird.f32 %v622
    %vm629 = vmor %vm627, %vm628
    %v630 = vsel %vm629, %v622, %v626
    %v631 = vand.u32 2147483647, %v621
    %vm632 = vcmp.eq.f32.partialorder %v631, 8.507059e+37
    %v633 = vand.u32 %v621, 2147483648
    %v634 = vor.u32 1.1754944e-38, %v633
    %v635 = vsel %vm632, %v634, %v630
    %v636 = vmul.f32 1.0, %v635
    %v637 = vtanh.pop %v617
    %v638 = vmul.f32 %v636, %v500
    %640 = vrot.lane.b32.xlu0 %v637, 64
    %v641 = vpop.permute.xlu0 %640
    %v643 = vmul.f32 %v636, %v641
    %645 = vrot.lane.b32.xlu0 %v643, 32
    %v646 = vpop.permute.xlu0 %645
    %v648 = vadd.f32 %v638, %v646
    %v649 = vtanh.pop %v648
    %651 = vrot.lane.b32.xlu0 %v649, 64
    %v652 = vpop.permute.xlu0 %651
    %v654 = vmul.f32 %v636, %v652
    %s655 = scalar_lea.vmem %s0, 8
    %v656 = vld [vmem:[%s655] sm:$0x3]
    %657 = vmatpush.msra.mxu0 0.0
    %658 = vmatpush.msra.mxu0 0.0
    %659 = vmatpush.msra.mxu0 0.0
    %660 = vmatpush.msra.mxu0 0.0
    %661 = vmatpush.msra.mxu0 0.0
    %662 = vmatpush.msra.mxu0 0.0
    %663 = vmatpush.msra.mxu0 0.0
    %664 = vmatpush.msra.mxu0 0.0
    %665 = vmatpush.msra.mxu0 0.0
    %666 = vmatpush.msra.mxu0 0.0
    %667 = vmatpush.msra.mxu0 0.0
    %668 = vmatpush.msra.mxu0 0.0
    %669 = vmatpush.msra.mxu0 %v52
    %670 = vmatpush.msra.mxu0 %v51
    %671 = vmatpush.msra.mxu0 %v50
    %672 = vmatpush.msra.mxu0 %v49
    %673 = vmatmul.f32.gmra.mxu0 %v595
    %v674 = vpop.f32.mrf.mxu0
    %v675 = vadd.f32 0.0, %v674
    %676 = vdwg.mxu0
    %v677 = vadd.f32 %v656, %v675
    %v678 = vxor.u32 %v677, 2147483648
    %v679 = vmul.f32 %v678, 1.442695
    %v680 = vpow.pop %v679
    %v681 = vadd.f32 %v680, 1.0
    %v682 = vrcp.pop %v681
    %v683 = vmul.f32 %v681, %v682
    %v684 = vsub.f32 1.0, %v683
    %v685 = vmul.f32 %v682, %v684
    %v686 = vadd.f32 %v682, %v685
    %vm687 = vweird.f32 %v681
    %vm688 = vweird.f32 %v682
    %vm689 = vmor %vm687, %vm688
    %v690 = vsel %vm689, %v682, %v686
    %v691 = vand.u32 2147483647, %v681
    %vm692 = vcmp.eq.f32.partialorder %v691, 8.507059e+37
    %v693 = vand.u32 %v681, 2147483648
    %v694 = vor.u32 1.1754944e-38, %v693
    %v695 = vsel %vm692, %v694, %v690
    %v696 = vmul.f32 1.0, %v695
    %v697 = vtanh.pop %v677
    %v698 = vmul.f32 %v696, %v560
    %700 = vrot.lane.b32.xlu0 %v697, 64
    %v701 = vpop.permute.xlu0 %700
    %v703 = vmul.f32 %v696, %v701
    %705 = vrot.lane.b32.xlu0 %v703, 32
    %v706 = vpop.permute.xlu0 %705
    %v708 = vadd.f32 %v698, %v706
    %v709 = vtanh.pop %v708
    %711 = vrot.lane.b32.xlu0 %v709, 64
    %v712 = vpop.permute.xlu0 %711
    %v714 = vmul.f32 %v696, %v712
    %716 = vrot.lane.b32.xlu0 %v654, 32
    %v717 = vpop.permute.xlu0 %716
    %v718 = vsel %vm66, %v717, 0
    %720 = vmatpush.msra.mxu0 0.0
    %721 = vmatpush.msra.mxu0 0.0
    %722 = vmatpush.msra.mxu0 0.0
    %723 = vmatpush.msra.mxu0 0.0
    %724 = vmatpush.msra.mxu0 0.0
    %725 = vmatpush.msra.mxu0 0.0
    %726 = vmatpush.msra.mxu0 0.0
    %727 = vmatpush.msra.mxu0 0.0
    %728 = vmatpush.msra.mxu0 0.0
    %729 = vmatpush.msra.mxu0 0.0
    %730 = vmatpush.msra.mxu0 0.0
    %731 = vmatpush.msra.mxu0 0.0
    %732 = vmatpush.msra.mxu0 %v60
    %733 = vmatpush.msra.mxu0 %v59
    %734 = vmatpush.msra.mxu0 %v58
    %735 = vmatpush.msra.mxu0 %v57
    %736 = vmatmul.f32.gmra.mxu0 %v718
    %v737 = vpop.f32.mrf.mxu0
    %v738 = vadd.f32 0.0, %v737
    %739 = vdwg.mxu0
    %741 = vrot.lane.b32.xlu0 %v714, 32
    %v742 = vpop.permute.xlu0 %741
    %v743 = vsel %vm66, %v742, 0
    %745 = vmatpush.msra.mxu0 0.0
    %746 = vmatpush.msra.mxu0 0.0
    %747 = vmatpush.msra.mxu0 0.0
    %748 = vmatpush.msra.mxu0 0.0
    %749 = vmatpush.msra.mxu0 0.0
    %750 = vmatpush.msra.mxu0 0.0
    %751 = vmatpush.msra.mxu0 0.0
    %752 = vmatpush.msra.mxu0 0.0
    %753 = vmatpush.msra.mxu0 0.0
    %754 = vmatpush.msra.mxu0 0.0
    %755 = vmatpush.msra.mxu0 0.0
    %756 = vmatpush.msra.mxu0 0.0
    %757 = vmatpush.msra.mxu0 %v56
    %758 = vmatpush.msra.mxu0 %v55
    %759 = vmatpush.msra.mxu0 %v54
    %760 = vmatpush.msra.mxu0 %v53
    %761 = vmatmul.f32.gmra.mxu0 %v743
    %v762 = vpop.f32.mrf.mxu0
    %v763 = vadd.f32 %v738, %v762
    %764 = vdwg.mxu0
    %v765 = vadd.f32 %v763, %v63
    %v766 = vxor.u32 %v765, 2147483648
    %v767 = vmul.f32 %v766, 1.442695
    %v768 = vpow.pop %v767
    %v769 = vadd.f32 %v768, 1.0
    %v770 = vrcp.pop %v769
    %v771 = vmul.f32 %v769, %v770
    %v772 = vsub.f32 1.0, %v771
    %v773 = vmul.f32 %v770, %v772
    %v774 = vadd.f32 %v770, %v773
    %vm775 = vweird.f32 %v769
    %vm776 = vweird.f32 %v770
    %vm777 = vmor %vm775, %vm776
    %v778 = vsel %vm777, %v770, %v774
    %v779 = vand.u32 2147483647, %v769
    %vm780 = vcmp.eq.f32.partialorder %v779, 8.507059e+37
    %v781 = vand.u32 %v769, 2147483648
    %v782 = vor.u32 1.1754944e-38, %v781
    %v783 = vsel %vm780, %v782, %v778
    %v784 = vmul.f32 1.0, %v783
    %v785 = vtanh.pop %v765
    %v786 = vmul.f32 %v784, %v648
    %788 = vrot.lane.b32.xlu0 %v785, 64
    %v789 = vpop.permute.xlu0 %788
    %v791 = vmul.f32 %v784, %v789
    %793 = vrot.lane.b32.xlu0 %v791, 32
    %v794 = vpop.permute.xlu0 %793
    %v796 = vadd.f32 %v786, %v794
    %v797 = vtanh.pop %v796
    %799 = vrot.lane.b32.xlu0 %v797, 64
    %v800 = vpop.permute.xlu0 %799
    %v802 = vmul.f32 %v784, %v800
    %s803 = scalar_lea.vmem %s0, 10
    %v804 = vld [vmem:[%s803] sm:$0x3]
    %805 = vmatpush.msra.mxu0 0.0
    %806 = vmatpush.msra.mxu0 0.0
    %807 = vmatpush.msra.mxu0 0.0
    %808 = vmatpush.msra.mxu0 0.0
    %809 = vmatpush.msra.mxu0 0.0
    %810 = vmatpush.msra.mxu0 0.0
    %811 = vmatpush.msra.mxu0 0.0
    %812 = vmatpush.msra.mxu0 0.0
    %813 = vmatpush.msra.mxu0 0.0
    %814 = vmatpush.msra.mxu0 0.0
    %815 = vmatpush.msra.mxu0 0.0
    %816 = vmatpush.msra.mxu0 0.0
    %817 = vmatpush.msra.mxu0 %v52
    %818 = vmatpush.msra.mxu0 %v51
    %819 = vmatpush.msra.mxu0 %v50
    %820 = vmatpush.msra.mxu0 %v49
    %821 = vmatmul.f32.gmra.mxu0 %v743
    %v822 = vpop.f32.mrf.mxu0
    %v823 = vadd.f32 0.0, %v822
    %824 = vdwg.mxu0
    %v825 = vadd.f32 %v804, %v823
    %v826 = vxor.u32 %v825, 2147483648
    %v827 = vmul.f32 %v826, 1.442695
    %v828 = vpow.pop %v827
    %v829 = vadd.f32 %v828, 1.0
    %v830 = vrcp.pop %v829
    %v831 = vmul.f32 %v829, %v830
    %v832 = vsub.f32 1.0, %v831
    %v833 = vmul.f32 %v830, %v832
    %v834 = vadd.f32 %v830, %v833
    %vm835 = vweird.f32 %v829
    %vm836 = vweird.f32 %v830
    %vm837 = vmor %vm835, %vm836
    %v838 = vsel %vm837, %v830, %v834
    %v839 = vand.u32 2147483647, %v829
    %vm840 = vcmp.eq.f32.partialorder %v839, 8.507059e+37
    %v841 = vand.u32 %v829, 2147483648
    %v842 = vor.u32 1.1754944e-38, %v841
    %v843 = vsel %vm840, %v842, %v838
    %v844 = vmul.f32 1.0, %v843
    %v845 = vtanh.pop %v825
    %v846 = vmul.f32 %v844, %v708
    %848 = vrot.lane.b32.xlu0 %v845, 64
    %v849 = vpop.permute.xlu0 %848
    %v851 = vmul.f32 %v844, %v849
    %853 = vrot.lane.b32.xlu0 %v851, 32
    %v854 = vpop.permute.xlu0 %853
    %v856 = vadd.f32 %v846, %v854
    %v857 = vtanh.pop %v856
    %859 = vrot.lane.b32.xlu0 %v857, 64
    %v860 = vpop.permute.xlu0 %859
    %v862 = vmul.f32 %v844, %v860
    %864 = vrot.lane.b32.xlu0 %v802, 32
    %v865 = vpop.permute.xlu0 %864
    %v866 = vsel %vm66, %v865, 0
    %868 = vmatpush.msra.mxu0 0.0
    %869 = vmatpush.msra.mxu0 0.0
    %870 = vmatpush.msra.mxu0 0.0
    %871 = vmatpush.msra.mxu0 0.0
    %872 = vmatpush.msra.mxu0 0.0
    %873 = vmatpush.msra.mxu0 0.0
    %874 = vmatpush.msra.mxu0 0.0
    %875 = vmatpush.msra.mxu0 0.0
    %876 = vmatpush.msra.mxu0 0.0
    %877 = vmatpush.msra.mxu0 0.0
    %878 = vmatpush.msra.mxu0 0.0
    %879 = vmatpush.msra.mxu0 0.0
    %880 = vmatpush.msra.mxu0 %v60
    %881 = vmatpush.msra.mxu0 %v59
    %882 = vmatpush.msra.mxu0 %v58
    %883 = vmatpush.msra.mxu0 %v57
    %884 = vmatmul.f32.gmra.mxu0 %v866
    %v885 = vpop.f32.mrf.mxu0
    %v886 = vadd.f32 0.0, %v885
    %887 = vdwg.mxu0
    %889 = vrot.lane.b32.xlu0 %v862, 32
    %v890 = vpop.permute.xlu0 %889
    %v891 = vsel %vm66, %v890, 0
    %893 = vmatpush.msra.mxu0 0.0
    %894 = vmatpush.msra.mxu0 0.0
    %895 = vmatpush.msra.mxu0 0.0
    %896 = vmatpush.msra.mxu0 0.0
    %897 = vmatpush.msra.mxu0 0.0
    %898 = vmatpush.msra.mxu0 0.0
    %899 = vmatpush.msra.mxu0 0.0
    %900 = vmatpush.msra.mxu0 0.0
    %901 = vmatpush.msra.mxu0 0.0
    %902 = vmatpush.msra.mxu0 0.0
    %903 = vmatpush.msra.mxu0 0.0
    %904 = vmatpush.msra.mxu0 0.0
    %905 = vmatpush.msra.mxu0 %v56
    %906 = vmatpush.msra.mxu0 %v55
    %907 = vmatpush.msra.mxu0 %v54
    %908 = vmatpush.msra.mxu0 %v53
    %909 = vmatmul.f32.gmra.mxu0 %v891
    %v910 = vpop.f32.mrf.mxu0
    %v911 = vadd.f32 %v886, %v910
    %912 = vdwg.mxu0
    %v913 = vadd.f32 %v911, %v63
    %v914 = vxor.u32 %v913, 2147483648
    %v915 = vmul.f32 %v914, 1.442695
    %v916 = vpow.pop %v915
    %v917 = vadd.f32 %v916, 1.0
    %v918 = vrcp.pop %v917
    %v919 = vmul.f32 %v917, %v918
    %v920 = vsub.f32 1.0, %v919
    %v921 = vmul.f32 %v918, %v920
    %v922 = vadd.f32 %v918, %v921
    %vm923 = vweird.f32 %v917
    %vm924 = vweird.f32 %v918
    %vm925 = vmor %vm923, %vm924
    %v926 = vsel %vm925, %v918, %v922
    %v927 = vand.u32 2147483647, %v917
    %vm928 = vcmp.eq.f32.partialorder %v927, 8.507059e+37
    %v929 = vand.u32 %v917, 2147483648
    %v930 = vor.u32 1.1754944e-38, %v929
    %v931 = vsel %vm928, %v930, %v926
    %v932 = vmul.f32 1.0, %v931
    %v933 = vtanh.pop %v913
    %v934 = vmul.f32 %v932, %v796
    %936 = vrot.lane.b32.xlu0 %v933, 64
    %v937 = vpop.permute.xlu0 %936
    %v939 = vmul.f32 %v932, %v937
    %941 = vrot.lane.b32.xlu0 %v939, 32
    %v942 = vpop.permute.xlu0 %941
    %v944 = vadd.f32 %v934, %v942
    %v945 = vtanh.pop %v944
    %947 = vrot.lane.b32.xlu0 %v945, 64
    %v948 = vpop.permute.xlu0 %947
    %v950 = vmul.f32 %v932, %v948
    %s951 = scalar_lea.vmem %s0, 12
    %v952 = vld [vmem:[%s951] sm:$0x3]
    %953 = vmatpush.msra.mxu0 0.0
    %954 = vmatpush.msra.mxu0 0.0
    %955 = vmatpush.msra.mxu0 0.0
    %956 = vmatpush.msra.mxu0 0.0
    %957 = vmatpush.msra.mxu0 0.0
    %958 = vmatpush.msra.mxu0 0.0
    %959 = vmatpush.msra.mxu0 0.0
    %960 = vmatpush.msra.mxu0 0.0
    %961 = vmatpush.msra.mxu0 0.0
    %962 = vmatpush.msra.mxu0 0.0
    %963 = vmatpush.msra.mxu0 0.0
    %964 = vmatpush.msra.mxu0 0.0
    %965 = vmatpush.msra.mxu0 %v52
    %966 = vmatpush.msra.mxu0 %v51
    %967 = vmatpush.msra.mxu0 %v50
    %968 = vmatpush.msra.mxu0 %v49
    %969 = vmatmul.f32.gmra.mxu0 %v891
    %v970 = vpop.f32.mrf.mxu0
    %v971 = vadd.f32 0.0, %v970
    %972 = vdwg.mxu0
    %v973 = vadd.f32 %v952, %v971
    %v974 = vxor.u32 %v973, 2147483648
    %v975 = vmul.f32 %v974, 1.442695
    %v976 = vpow.pop %v975
    %v977 = vadd.f32 %v976, 1.0
    %v978 = vrcp.pop %v977
    %v979 = vmul.f32 %v977, %v978
    %v980 = vsub.f32 1.0, %v979
    %v981 = vmul.f32 %v978, %v980
    %v982 = vadd.f32 %v978, %v981
    %vm983 = vweird.f32 %v977
    %vm984 = vweird.f32 %v978
    %vm985 = vmor %vm983, %vm984
    %v986 = vsel %vm985, %v978, %v982
    %v987 = vand.u32 2147483647, %v977
    %vm988 = vcmp.eq.f32.partialorder %v987, 8.507059e+37
    %v989 = vand.u32 %v977, 2147483648
    %v990 = vor.u32 1.1754944e-38, %v989
    %v991 = vsel %vm988, %v990, %v986
    %v992 = vmul.f32 1.0, %v991
    %v993 = vtanh.pop %v973
    %v994 = vmul.f32 %v992, %v856
    %996 = vrot.lane.b32.xlu0 %v993, 64
    %v997 = vpop.permute.xlu0 %996
    %v999 = vmul.f32 %v992, %v997
    %1001 = vrot.lane.b32.xlu0 %v999, 32
    %v1002 = vpop.permute.xlu0 %1001
    %v1004 = vadd.f32 %v994, %v1002
    %v1005 = vtanh.pop %v1004
    %1007 = vrot.lane.b32.xlu0 %v1005, 64
    %v1008 = vpop.permute.xlu0 %1007
    %v1010 = vmul.f32 %v992, %v1008
    %1012 = vrot.lane.b32.xlu0 %v950, 32
    %v1013 = vpop.permute.xlu0 %1012
    %v1014 = vsel %vm66, %v1013, 0
    %1016 = vmatpush.msra.mxu0 0.0
    %1017 = vmatpush.msra.mxu0 0.0
    %1018 = vmatpush.msra.mxu0 0.0
    %1019 = vmatpush.msra.mxu0 0.0
    %1020 = vmatpush.msra.mxu0 0.0
    %1021 = vmatpush.msra.mxu0 0.0
    %1022 = vmatpush.msra.mxu0 0.0
    %1023 = vmatpush.msra.mxu0 0.0
    %1024 = vmatpush.msra.mxu0 0.0
    %1025 = vmatpush.msra.mxu0 0.0
    %1026 = vmatpush.msra.mxu0 0.0
    %1027 = vmatpush.msra.mxu0 0.0
    %1028 = vmatpush.msra.mxu0 %v60
    %1029 = vmatpush.msra.mxu0 %v59
    %1030 = vmatpush.msra.mxu0 %v58
    %1031 = vmatpush.msra.mxu0 %v57
    %1032 = vmatmul.f32.gmra.mxu0 %v1014
    %v1033 = vpop.f32.mrf.mxu0
    %v1034 = vadd.f32 0.0, %v1033
    %1035 = vdwg.mxu0
    %1037 = vrot.lane.b32.xlu0 %v1010, 32
    %v1038 = vpop.permute.xlu0 %1037
    %v1039 = vsel %vm66, %v1038, 0
    %1041 = vmatpush.msra.mxu0 0.0
    %1042 = vmatpush.msra.mxu0 0.0
    %1043 = vmatpush.msra.mxu0 0.0
    %1044 = vmatpush.msra.mxu0 0.0
    %1045 = vmatpush.msra.mxu0 0.0
    %1046 = vmatpush.msra.mxu0 0.0
    %1047 = vmatpush.msra.mxu0 0.0
    %1048 = vmatpush.msra.mxu0 0.0
    %1049 = vmatpush.msra.mxu0 0.0
    %1050 = vmatpush.msra.mxu0 0.0
    %1051 = vmatpush.msra.mxu0 0.0
    %1052 = vmatpush.msra.mxu0 0.0
    %1053 = vmatpush.msra.mxu0 %v56
    %1054 = vmatpush.msra.mxu0 %v55
    %1055 = vmatpush.msra.mxu0 %v54
    %1056 = vmatpush.msra.mxu0 %v53
    %1057 = vmatmul.f32.gmra.mxu0 %v1039
    %v1058 = vpop.f32.mrf.mxu0
    %v1059 = vadd.f32 %v1034, %v1058
    %1060 = vdwg.mxu0
    %v1061 = vadd.f32 %v1059, %v63
    %v1062 = vxor.u32 %v1061, 2147483648
    %v1063 = vmul.f32 %v1062, 1.442695
    %v1064 = vpow.pop %v1063
    %v1065 = vadd.f32 %v1064, 1.0
    %v1066 = vrcp.pop %v1065
    %v1067 = vmul.f32 %v1065, %v1066
    %v1068 = vsub.f32 1.0, %v1067
    %v1069 = vmul.f32 %v1066, %v1068
    %v1070 = vadd.f32 %v1066, %v1069
    %vm1071 = vweird.f32 %v1065
    %vm1072 = vweird.f32 %v1066
    %vm1073 = vmor %vm1071, %vm1072
    %v1074 = vsel %vm1073, %v1066, %v1070
    %v1075 = vand.u32 2147483647, %v1065
    %vm1076 = vcmp.eq.f32.partialorder %v1075, 8.507059e+37
    %v1077 = vand.u32 %v1065, 2147483648
    %v1078 = vor.u32 1.1754944e-38, %v1077
    %v1079 = vsel %vm1076, %v1078, %v1074
    %v1080 = vmul.f32 1.0, %v1079
    %v1081 = vtanh.pop %v1061
    %v1082 = vmul.f32 %v1080, %v944
    %1084 = vrot.lane.b32.xlu0 %v1081, 64
    %v1085 = vpop.permute.xlu0 %1084
    %v1087 = vmul.f32 %v1080, %v1085
    %1089 = vrot.lane.b32.xlu0 %v1087, 32
    %v1090 = vpop.permute.xlu0 %1089
    %v1092 = vadd.f32 %v1082, %v1090
    %v1093 = vtanh.pop %v1092
    %1095 = vrot.lane.b32.xlu0 %v1093, 64
    %v1096 = vpop.permute.xlu0 %1095
    %v1098 = vmul.f32 %v1080, %v1096
    %s1099 = scalar_lea.vmem %s0, 14
    %v1100 = vld [vmem:[%s1099] sm:$0x3]
    %1101 = vmatpush.msra.mxu0 0.0
    %1102 = vmatpush.msra.mxu0 0.0
    %1103 = vmatpush.msra.mxu0 0.0
    %1104 = vmatpush.msra.mxu0 0.0
    %1105 = vmatpush.msra.mxu0 0.0
    %1106 = vmatpush.msra.mxu0 0.0
    %1107 = vmatpush.msra.mxu0 0.0
    %1108 = vmatpush.msra.mxu0 0.0
    %1109 = vmatpush.msra.mxu0 0.0
    %1110 = vmatpush.msra.mxu0 0.0
    %1111 = vmatpush.msra.mxu0 0.0
    %1112 = vmatpush.msra.mxu0 0.0
    %1113 = vmatpush.msra.mxu0 %v52
    %1114 = vmatpush.msra.mxu0 %v51
    %1115 = vmatpush.msra.mxu0 %v50
    %1116 = vmatpush.msra.mxu0 %v49
    %1117 = vmatmul.f32.gmra.mxu0 %v1039
    %v1118 = vpop.f32.mrf.mxu0
    %v1119 = vadd.f32 0.0, %v1118
    %1120 = vdwg.mxu0
    %v1121 = vadd.f32 %v1100, %v1119
    %v1122 = vxor.u32 %v1121, 2147483648
    %v1123 = vmul.f32 %v1122, 1.442695
    %v1124 = vpow.pop %v1123
    %v1125 = vadd.f32 %v1124, 1.0
    %v1126 = vrcp.pop %v1125
    %v1127 = vmul.f32 %v1125, %v1126
    %v1128 = vsub.f32 1.0, %v1127
    %v1129 = vmul.f32 %v1126, %v1128
    %v1130 = vadd.f32 %v1126, %v1129
    %vm1131 = vweird.f32 %v1125
    %vm1132 = vweird.f32 %v1126
    %vm1133 = vmor %vm1131, %vm1132
    %v1134 = vsel %vm1133, %v1126, %v1130
    %v1135 = vand.u32 2147483647, %v1125
    %vm1136 = vcmp.eq.f32.partialorder %v1135, 8.507059e+37
    %v1137 = vand.u32 %v1125, 2147483648
    %v1138 = vor.u32 1.1754944e-38, %v1137
    %v1139 = vsel %vm1136, %v1138, %v1134
    %v1140 = vmul.f32 1.0, %v1139
    %v1141 = vtanh.pop %v1121
    %v1142 = vmul.f32 %v1140, %v1004
    %1144 = vrot.lane.b32.xlu0 %v1141, 64
    %v1145 = vpop.permute.xlu0 %1144
    %v1147 = vmul.f32 %v1140, %v1145
    %1149 = vrot.lane.b32.xlu0 %v1147, 32
    %v1150 = vpop.permute.xlu0 %1149
    %v1152 = vadd.f32 %v1142, %v1150
    %v1153 = vtanh.pop %v1152
    %1155 = vrot.lane.b32.xlu0 %v1153, 64
    %v1156 = vpop.permute.xlu0 %1155
    %v1158 = vmul.f32 %v1140, %v1156
    %1160 = vrot.lane.b32.xlu0 %v1098, 32
    %v1161 = vpop.permute.xlu0 %1160
    %v1162 = vsel %vm66, %v1161, 0
    %1164 = vmatpush.msra.mxu0 0.0
    %1165 = vmatpush.msra.mxu0 0.0
    %1166 = vmatpush.msra.mxu0 0.0
    %1167 = vmatpush.msra.mxu0 0.0
    %1168 = vmatpush.msra.mxu0 0.0
    %1169 = vmatpush.msra.mxu0 0.0
    %1170 = vmatpush.msra.mxu0 0.0
    %1171 = vmatpush.msra.mxu0 0.0
    %1172 = vmatpush.msra.mxu0 0.0
    %1173 = vmatpush.msra.mxu0 0.0
    %1174 = vmatpush.msra.mxu0 0.0
    %1175 = vmatpush.msra.mxu0 0.0
    %1176 = vmatpush.msra.mxu0 %v60
    %1177 = vmatpush.msra.mxu0 %v59
    %1178 = vmatpush.msra.mxu0 %v58
    %1179 = vmatpush.msra.mxu0 %v57
    %1180 = vmatmul.f32.gmra.mxu0 %v1162
    %v1181 = vpop.f32.mrf.mxu0
    %v1182 = vadd.f32 0.0, %v1181
    %1183 = vdwg.mxu0
    %1185 = vrot.lane.b32.xlu0 %v1158, 32
    %v1186 = vpop.permute.xlu0 %1185
    %v1187 = vsel %vm66, %v1186, 0
    %1189 = vmatpush.msra.mxu0 0.0
    %1190 = vmatpush.msra.mxu0 0.0
    %1191 = vmatpush.msra.mxu0 0.0
    %1192 = vmatpush.msra.mxu0 0.0
    %1193 = vmatpush.msra.mxu0 0.0
    %1194 = vmatpush.msra.mxu0 0.0
    %1195 = vmatpush.msra.mxu0 0.0
    %1196 = vmatpush.msra.mxu0 0.0
    %1197 = vmatpush.msra.mxu0 0.0
    %1198 = vmatpush.msra.mxu0 0.0
    %1199 = vmatpush.msra.mxu0 0.0
    %1200 = vmatpush.msra.mxu0 0.0
    %1201 = vmatpush.msra.mxu0 %v56
    %1202 = vmatpush.msra.mxu0 %v55
    %1203 = vmatpush.msra.mxu0 %v54
    %1204 = vmatpush.msra.mxu0 %v53
    %1205 = vmatmul.f32.gmra.mxu0 %v1187
    %v1206 = vpop.f32.mrf.mxu0
    %v1207 = vadd.f32 %v1182, %v1206
    %1208 = vdwg.mxu0
    %v1209 = vadd.f32 %v1207, %v63
    %v1210 = vxor.u32 %v1209, 2147483648
    %v1211 = vmul.f32 %v1210, 1.442695
    %v1212 = vpow.pop %v1211
    %v1213 = vadd.f32 %v1212, 1.0
    %v1214 = vrcp.pop %v1213
    %v1215 = vmul.f32 %v1213, %v1214
    %v1216 = vsub.f32 1.0, %v1215
    %v1217 = vmul.f32 %v1214, %v1216
    %v1218 = vadd.f32 %v1214, %v1217
    %vm1219 = vweird.f32 %v1213
    %vm1220 = vweird.f32 %v1214
    %vm1221 = vmor %vm1219, %vm1220
    %v1222 = vsel %vm1221, %v1214, %v1218
    %v1223 = vand.u32 2147483647, %v1213
    %vm1224 = vcmp.eq.f32.partialorder %v1223, 8.507059e+37
    %v1225 = vand.u32 %v1213, 2147483648
    %v1226 = vor.u32 1.1754944e-38, %v1225
    %v1227 = vsel %vm1224, %v1226, %v1222
    %v1228 = vmul.f32 1.0, %v1227
    %v1229 = vtanh.pop %v1209
    %v1230 = vmul.f32 %v1228, %v1092
    %1232 = vrot.lane.b32.xlu0 %v1229, 64
    %v1233 = vpop.permute.xlu0 %1232
    %v1235 = vmul.f32 %v1228, %v1233
    %1237 = vrot.lane.b32.xlu0 %v1235, 32
    %v1238 = vpop.permute.xlu0 %1237
    %v1240 = vadd.f32 %v1230, %v1238
    %v1241 = vtanh.pop %v1240
    %1243 = vrot.lane.b32.xlu0 %v1241, 64
    %v1244 = vpop.permute.xlu0 %1243
    %v1246 = vmul.f32 %v1228, %v1244
    %v1247 = vld [vmem:[%s6] sm:$0xff]
    %v1248 = vld [vmem:[%s6 + $0x8] sm:$0xff]
    %v1249 = vld [vmem:[%s6 + $0x10] sm:$0xff]
    %v1250 = vld [vmem:[%s6 + $0x18] sm:$0xff]
    %v1251 = vld [vmem:[%s5] sm:$0x3]
    %v1252 = vld [vmem:[%s7] sm:$0xff]
    %vm1253 = vcmask 64512
    %v1255 = vsel %vm1253, %v1251, 0
    %1257 = vmatpush.msra.mxu0 0.0
    %1258 = vmatpush.msra.mxu0 0.0
    %1259 = vmatpush.msra.mxu0 0.0
    %1260 = vmatpush.msra.mxu0 0.0
    %1261 = vmatpush.msra.mxu0 0.0
    %1262 = vmatpush.msra.mxu0 0.0
    %1263 = vmatpush.msra.mxu0 0.0
    %1264 = vmatpush.msra.mxu0 0.0
    %1265 = vmatpush.msra.mxu0 0.0
    %1266 = vmatpush.msra.mxu0 0.0
    %1267 = vmatpush.msra.mxu0 0.0
    %1268 = vmatpush.msra.mxu0 0.0
    %1269 = vmatpush.msra.mxu0 0.0
    %1270 = vmatpush.msra.mxu0 0.0
    %1271 = vmatpush.msra.mxu0 0.0
    %1272 = vmatpush.msra.mxu0 %v1252
    %1273 = vmatmul.f32.gmra.mxu0 %v1255
    %v1274 = vpop.f32.mrf.mxu0
    %v1275 = vadd.f32 0.0, %v1274
    %1276 = vdwg.mxu0
    %1278 = vrot.lane.b32.xlu0 %v1246, 32
    %v1279 = vpop.permute.xlu0 %1278
    %v1280 = vsel %vm66, %v1279, 0
    %1282 = vmatpush.msra.mxu0 0.0
    %1283 = vmatpush.msra.mxu0 0.0
    %1284 = vmatpush.msra.mxu0 0.0
    %1285 = vmatpush.msra.mxu0 0.0
    %1286 = vmatpush.msra.mxu0 0.0
    %1287 = vmatpush.msra.mxu0 0.0
    %1288 = vmatpush.msra.mxu0 0.0
    %1289 = vmatpush.msra.mxu0 0.0
    %1290 = vmatpush.msra.mxu0 0.0
    %1291 = vmatpush.msra.mxu0 0.0
    %1292 = vmatpush.msra.mxu0 0.0
    %1293 = vmatpush.msra.mxu0 0.0
    %1294 = vmatpush.msra.mxu0 %v1250
    %1295 = vmatpush.msra.mxu0 %v1249
    %1296 = vmatpush.msra.mxu0 %v1248
    %1297 = vmatpush.msra.mxu0 %v1247
    %1298 = vmatmul.f32.gmra.mxu0 %v1280
    %v1299 = vpop.f32.mrf.mxu0
    %v1300 = vadd.f32 %v1275, %v1299
    %1301 = vdwg.mxu0
    %v1302 = vld [vmem:[%s8] sm:$0x1]
    %v1304 = vperm.slane %v1302, 0
    %v1306 = vadd.f32 %v1300, %v1304
    %v1307 = vmax.f32 %v1306, 0.0
    %v1308 = vld [vmem:[%s9] sm:$0xff]
    %v1309 = vld [vmem:[%s9 + $0x8] sm:$0xff]
    %v1310 = vld [vmem:[%s9 + $0x10] sm:$0xff]
    %v1311 = vld [vmem:[%s9 + $0x18] sm:$0xff]
    %v1312 = vld [vmem:[%s10] sm:$0x1]
    %v1314 = vperm.slane %v1312, 0
    %v1317 = vsel %vm66, %v1307, 0
    %1319 = vmatpush.msra.mxu0 0.0
    %1320 = vmatpush.msra.mxu0 0.0
    %1321 = vmatpush.msra.mxu0 0.0
    %1322 = vmatpush.msra.mxu0 0.0
    %1323 = vmatpush.msra.mxu0 0.0
    %1324 = vmatpush.msra.mxu0 0.0
    %1325 = vmatpush.msra.mxu0 0.0
    %1326 = vmatpush.msra.mxu0 0.0
    %1327 = vmatpush.msra.mxu0 0.0
    %1328 = vmatpush.msra.mxu0 0.0
    %1329 = vmatpush.msra.mxu0 0.0
    %1330 = vmatpush.msra.mxu0 0.0
    %1331 = vmatpush.msra.mxu0 %v1311
    %1332 = vmatpush.msra.mxu0 %v1310
    %1333 = vmatpush.msra.mxu0 %v1309
    %1334 = vmatpush.msra.mxu0 %v1308
    %1335 = vmatmul.f32.gmra.mxu0 %v1317
    %v1336 = vpop.f32.mrf.mxu0
    %v1337 = vadd.f32 %v1314, %v1336
    %1338 = vdwg.mxu0
    %v1339 = vmax.f32 %v1337, 0.0
    %v1340 = vld [vmem:[%s11] sm:$0xff]
    %v1341 = vld [vmem:[%s11 + $0x8] sm:$0xff]
    %v1342 = vld [vmem:[%s11 + $0x10] sm:$0xff]
    %v1343 = vld [vmem:[%s11 + $0x18] sm:$0xff]
    %v1344 = vld [vmem:[%s12] sm:$0x1]
    %v1346 = vperm.slane %v1344, 0
    %v1349 = vsel %vm66, %v1339, 0
    %1351 = vmatpush.msra.mxu0 0.0
    %1352 = vmatpush.msra.mxu0 0.0
    %1353 = vmatpush.msra.mxu0 0.0
    %1354 = vmatpush.msra.mxu0 0.0
    %1355 = vmatpush.msra.mxu0 0.0
    %1356 = vmatpush.msra.mxu0 0.0
    %1357 = vmatpush.msra.mxu0 0.0
    %1358 = vmatpush.msra.mxu0 0.0
    %1359 = vmatpush.msra.mxu0 0.0
    %1360 = vmatpush.msra.mxu0 0.0
    %1361 = vmatpush.msra.mxu0 0.0
    %1362 = vmatpush.msra.mxu0 0.0
    %1363 = vmatpush.msra.mxu0 %v1343
    %1364 = vmatpush.msra.mxu0 %v1342
    %1365 = vmatpush.msra.mxu0 %v1341
    %1366 = vmatpush.msra.mxu0 %v1340
    %1367 = vmatmul.f32.gmra.mxu0 %v1349
    %v1368 = vpop.f32.mrf.mxu0
    %v1369 = vadd.f32 %v1346, %v1368
    %1370 = vdwg.mxu0
    %vm1371 = vcmask 17408
    %1372 = vst.msk [vmem:[#allocation2] sm:$0x3] %vm1371, %v1369
    %vm1374 = vcmask 254976
    %1375 = vst.msk [vmem:[#allocation4] sm:$0x3] %vm1374, %v1186
    %s1377 = scalar_lea.vmem [#allocation4], 2
    %1378 = vst.msk [vmem:[%s1377] sm:$0x3] %vm1374, %v1279
    %1380 = vrot.lane.b32.xlu0 %v1152, 96
    %v1381 = vpop.permute.xlu0 %1380
    %1383 = vst.msk [vmem:[#allocation6] sm:$0x3] %vm1374, %v1381
    %1385 = vrot.lane.b32.xlu0 %v1240, 96
    %v1386 = vpop.permute.xlu0 %1385
    %s1388 = scalar_lea.vmem [#allocation6], 2
    %1389 = vst.msk [vmem:[%s1388] sm:$0x3] %vm1374, %v1386
    // Predicated region
    $region54: #{network2_forward.1} parent=1 // pred_check
      _
    $region55: #{network2_forward.1} parent=1 // pred_check_branch
      %1391 = sbr.rel (0) target = $region57
    $region56: #{network2_forward.1} parent=1 // pred_region
      %1393 = vsyncadd [#allocation3], 0
      %s1395 = sshll.u32 [#allocation2], 4
      %s1396 = int_to_ptr.vmem [resolvable:$true] %s1395
      %s1397 = sshll.u32 %s13, 4
      %s1398 = int_to_ptr.hbm [resolvable:$true] %s1397
      %1400 = dma.vmem_to_hbm [thread:$0]  %s1396, 32, %s1398, [#allocation3]
    $region57: #{network2_forward.1} parent=1 // pred_fallthru
      _
    // Predicated region
    $region58: #{network2_forward.1} parent=1 // pred_check
      _
    $region59: #{network2_forward.1} parent=1 // pred_check_branch
      %1402 = sbr.rel (0) target = $region61
    $region60: #{network2_forward.1} parent=1 // pred_region
      %1404 = vsyncadd [#allocation5], 0
      %s1405 = sshll.u32 [#allocation4], 4
      %s1406 = int_to_ptr.vmem [resolvable:$true] %s1405
      %s1407 = sshll.u32 %s14, 4
      %s1408 = int_to_ptr.hbm [resolvable:$true] %s1407
      %1413 = dma.vmem_to_hbm [thread:$0]  %s1406, 64, %s1408, [#allocation5], 32, 32, 2
    $region61: #{network2_forward.1} parent=1 // pred_fallthru
      _
    // Predicated region
    $region62: #{network2_forward.1} parent=1 // pred_check
      _
    $region63: #{network2_forward.1} parent=1 // pred_check_branch
      %1415 = sbr.rel (0) target = $region65
    $region64: #{network2_forward.1} parent=1 // pred_region
      %1417 = vsyncadd [#allocation5], 0
      %s1418 = sshll.u32 [#allocation6], 4
      %s1419 = int_to_ptr.vmem [resolvable:$true] %s1418
      %s1420 = sshll.u32 %s15, 4
      %s1421 = int_to_ptr.hbm [resolvable:$true] %s1420
      %1426 = dma.vmem_to_hbm [thread:$0]  %s1419, 64, %s1421, [#allocation5], 32, 32, 2
    $region65: #{network2_forward.1} parent=1 // pred_fallthru
      _
    // Predicated region
    $region66: #{network2_forward.1} parent=1 // pred_check
      _
    $region67: #{network2_forward.1} parent=1 // pred_check_branch
      %1428 = sbr.rel (0) target = $region69
    $region68: #{network2_forward.1} parent=1 // pred_region
      %1430 = dma.done [#allocation3], 32
    $region69: #{network2_forward.1} parent=1 // pred_fallthru
      _
    // Predicated region
    $region70: #{network2_forward.1} parent=1 // pred_check
      _
    $region71: #{network2_forward.1} parent=1 // pred_check_branch
      %1432 = sbr.rel (0) target = $region73
    $region72: #{network2_forward.1} parent=1 // pred_region
      %1434 = dma.done [#allocation5], 64
    $region73: #{network2_forward.1} parent=1 // pred_fallthru
      _
    // Predicated region
    $region74: #{network2_forward.1} parent=1 // pred_check
      _
    $region75: #{network2_forward.1} parent=1 // pred_check_branch
      %1436 = sbr.rel (0) target = $region77
    $region76: #{network2_forward.1} parent=1 // pred_region
      %1438 = dma.done [#allocation5], 64
    $region77: #{network2_forward.1} parent=1 // pred_fallthru
      _
    %1439 = vsyncpa [#allocation3], 1
    %1440 = vsyncpa [#allocation5], 1

</llo_original>
